<compile_context>
chip_gen: v6e
topology: v6e:2x2x1
jax: 0.10.0
libtpu: 0.0.40
codegen_flags: <defaults>
</compile_context>

<pallas_src>
import functools

import jax
import jax.numpy as jnp
import numpy as np
from jax import lax
from jax.experimental import pallas as pl
from jax.experimental.pallas import tpu as pltpu


def _round_up(x, m):
    return (x + m - 1) // m * m


def _mlconv_kernel(x_ref, halo_ref, w1_ref, b1_ref, w2_ref, b2_ref, o_ref,
                   *, kernel_size, halo_rows, t_valid):
    """One (batch, time-tile) block per grid step.

    x_ref   : (1, tT, Cp)      bf16  main input tile (non-overlapping)
    halo_ref: (1, 1, 2*HP, Cp) bf16  sublane-aligned left+right halo rows
    w1_ref  : (K*Cp, Hp)       bf16  conv1 weights, taps fused along rows
    b1_ref  : (1, Hp)          f32
    w2_ref  : (K, Hp, Cp)      bf16  conv2 weights, one matrix per tap
    b2_ref  : (1, Cp)          f32
    o_ref   : (1, tT, Cp)
    """
    K = kernel_size
    pad = (K - 1) // 2
    hw = K - 1                      # halo rows actually consumed per side
    HP = halo_rows                  # sublane-aligned halo rows fetched per side
    tT = o_ref.shape[1]
    rows_h = tT + 2 * pad           # hidden rows this tile's conv2 consumes
    a = HP - hw                     # offset of first consumed halo row

    x_tile = x_ref[0]               # (tT, Cp)
    halo = halo_ref[0, 0]           # (2*HP, Cp)

    # Sublane-aligned input window covering global rows [t0 - HP, t0 + tT + HP).
    xwin = jnp.concatenate([halo[:HP, :], x_tile, halo[HP:, :]], axis=0)

    # Zero rows outside the valid sequence [0, t_valid): implements Conv1d's
    # zero padding of the input, cleans the clamped host-side halo gather and
    # the unspecified tail of the partial boundary block.
    t0 = pl.program_id(1) * tT
    gin = t0 - HP + lax.broadcasted_iota(jnp.int32, (tT + 2 * HP, 1), 0)
    xwin = jnp.where((gin >= 0) & (gin < t_valid), xwin,
                     jnp.zeros((), xwin.dtype))

    # ---- conv1: K taps fused into one long-contraction bf16 matmul --------
    xk = jnp.concatenate([xwin[a + k:a + k + rows_h, :] for k in range(K)],
                         axis=-1)                        # (rows_h, K*Cp)
    h = jnp.dot(xk, w1_ref[...], preferred_element_type=jnp.float32)
    h = jnp.maximum(h + b1_ref[...], 0.0)

    # Conv1d's zero padding of the hidden activations: mask rows whose global
    # time index falls outside [0, t_valid).  (Kept unconditional: VPU filler,
    # not the binding slot.)
    gh = t0 - pad + lax.broadcasted_iota(jnp.int32, (rows_h, 1), 0)
    h = jnp.where((gh >= 0) & (gh < t_valid), h, 0.0)

    # dropout: identity in eval mode.
    h = h.astype(jnp.bfloat16)

    # ---- conv2: K per-tap matmuls, accumulating shifted Cp-wide f32 partials
    y = jnp.dot(h, w2_ref[0], preferred_element_type=jnp.float32)[:tT, :]
    for k in range(1, K):
        y = y + jnp.dot(h, w2_ref[k],
                        preferred_element_type=jnp.float32)[k:k + tT, :]
    o_ref[0] = (y + b2_ref[...]).astype(o_ref.dtype)


def multi_layered_conv1d(x, w1, b1, w2, b2, kernel_size, *, time_tile=256,
                         vmem_limit_bytes=48 * 1024 * 1024):
    """x: (B, T, Cin). w1: (K, Cin, H), b1: (H,), w2: (K, H, Cin), b2: (Cin,)."""
    B, T, Cin = x.shape
    K = kernel_size
    assert K % 2 == 1 and K >= 1, "odd kernel_size expected (same-length conv)"
    H = w1.shape[2]
    hw = K - 1
    HP = max(8, _round_up(hw, 8))       # sublane-aligned halo rows per side

    # ---- lane-dense channel padding (no-op for aligned production dims) ---
    Cp = _round_up(Cin, 128)
    Hp = _round_up(H, 128)

    # Activations live in HBM as bf16 (halves DMA / VMEM).
    xb = x.astype(jnp.bfloat16)
    if Cp != Cin:
        xb = jnp.pad(xb, ((0, 0), (0, 0), (0, Cp - Cin)))

    w1p = jnp.pad(w1, ((0, 0), (0, Cp - Cin), (0, Hp - H)))
    w2p = jnp.pad(w2, ((0, 0), (0, Hp - H), (0, Cp - Cin)))
    b1p = jnp.pad(b1, (0, Hp - H)).reshape(1, Hp).astype(jnp.float32)
    b2p = jnp.pad(b2, (0, Cp - Cin)).reshape(1, Cp).astype(jnp.float32)

    # conv1: fuse K taps into one (K*Cp, Hp) matrix (rows ordered (tap, cin)).
    w1f = w1p.reshape(K * Cp, Hp).astype(jnp.bfloat16)
    # conv2: per-tap (K, Hp, Cp) matrices (outputs are shifted, not inputs).
    w2t = w2p.astype(jnp.bfloat16)

    # ---- time tiling: grid over-covers T; ragged tail handled in-kernel ---
    tT = min(_round_up(time_tile, 8), _round_up(T, 8))
    nT = -(-T // tT)

    # ---- tiny sublane-aligned halo tensor: (B, nT, 2*HP, Cp) ---------------
    t0 = jnp.arange(nT, dtype=jnp.int32) * tT
    off = jnp.concatenate([jnp.arange(-HP, 0, dtype=jnp.int32),
                           jnp.arange(tT, tT + HP, dtype=jnp.int32)])
    pos = jnp.clip(t0[:, None] + off[None, :], 0, T - 1)     # (nT, 2*HP)
    halo = jnp.take(xb, pos, axis=1)                         # (B, nT, 2*HP, Cp)
    # rows outside [0, T) are zeroed inside the kernel (no host-side mask).

    kernel = functools.partial(_mlconv_kernel, kernel_size=K, halo_rows=HP,
                               t_valid=T)

    cost = pl.CostEstimate(
        flops=int(4 * B * nT * tT * K * Cp * Hp),        # 2 convs x 2 flops/MAC
        transcendentals=0,
        bytes_accessed=int(xb.size * 2 + halo.size * 2 + w1f.size * 2
                           + w2t.size * 2 + b1p.size * 4 + b2p.size * 4
                           + B * T * Cp * jnp.dtype(x.dtype).itemsize))

    def _call(single_buffer_weights):
        if single_buffer_weights and hasattr(pl, "Buffered"):
            def const(s):
                return pl.BlockSpec(s, lambda b, t: (0,) * len(s),
                                    pipeline_mode=pl.Buffered(1))
        else:
            def const(s):
                return pl.BlockSpec(s, lambda b, t: (0,) * len(s))
        return pl.pallas_call(
            kernel,
            out_shape=jax.ShapeDtypeStruct((B, T, Cp), x.dtype),
            grid_spec=pltpu.PrefetchScalarGridSpec(
                num_scalar_prefetch=0,
                grid=(B, nT),
                in_specs=[
                    pl.BlockSpec((1, tT, Cp), lambda b, t: (b, t, 0)),
                    pl.BlockSpec((1, 1, 2 * HP, Cp), lambda b, t: (b, t, 0, 0)),
                    const((K * Cp, Hp)),
                    const((1, Hp)),
                    const((K, Hp, Cp)),
                    const((1, Cp)),
                ],
                out_specs=pl.BlockSpec((1, tT, Cp), lambda b, t: (b, t, 0)),
            ),
            compiler_params=pltpu.CompilerParams(
                dimension_semantics=("parallel", "parallel"),
                vmem_limit_bytes=vmem_limit_bytes),
            cost_estimate=cost,
        )(xb, halo, w1f, b1p, w2t, b2p)

    try:
        out = _call(True)          # single-buffer the loop-invariant weights
    except Exception:              # fallback if Buffered(1) is unsupported
        out = _call(False)

    return out if Cp == Cin else out[:, :, :Cin]


def _bf16_round(a):
    return np.asarray(jnp.asarray(a, jnp.float32)
                      .astype(jnp.bfloat16).astype(jnp.float32))


def _reference(x, w1, b1, w2, b2, K):
    """NumPy reference (PyTorch Conv1d semantics), mirroring the kernel's
    bf16-operand / f32-accumulation numerics for a tight comparison."""
    xb, w1b, w2b = _bf16_round(x), _bf16_round(w1), _bf16_round(w2)
    b1 = np.asarray(b1, np.float32)
    b2 = np.asarray(b2, np.float32)
    B, T, Cin = xb.shape
    H = w1b.shape[2]
    pad = (K - 1) // 2
    xp = np.zeros((B, T + K - 1, Cin), np.float32)
    xp[:, pad:pad + T] = xb
    h = np.zeros((B, T, H), np.float32)
    for k in range(K):
        h = h + np.einsum("btc,ch->bth", xp[:, k:k + T], w1b[k])
    h = np.maximum(h + b1[None, None, :], 0.0)
    h = _bf16_round(h)
    hp = np.zeros((B, T + K - 1, H), np.float32)
    hp[:, pad:pad + T] = h
    y = np.zeros((B, T, Cin), np.float32)
    for k in range(K):
        y = y + np.einsum("bth,hc->btc", hp[:, k:k + T], w2b[k])
    return y + b2[None, None, :]


if __name__ == "__main__":
    B, T = 2, 20                     # T deliberately not a tile multiple
    in_chans, hidden_chans, kernel_size = 8, 32, 3

    key = jax.random.PRNGKey(0)
    kx, k1, k2, k3, k4 = jax.random.split(key, 5)

    x = jax.random.normal(kx, (B, T, in_chans), jnp.float32)
    # deterministic parameter init (shapes from nn.Conv1d), taps-first layout
    s1 = 1.0 / np.sqrt(in_chans * kernel_size)
    s2 = 1.0 / np.sqrt(hidden_chans * kernel_size)
    w1 = jax.random.uniform(k1, (kernel_size, in_chans, hidden_chans),
                            jnp.float32, -s1, s1)
    b1 = jax.random.uniform(k2, (hidden_chans,), jnp.float32, -s1, s1)
    w2 = jax.random.uniform(k3, (kernel_size, hidden_chans, in_chans),
                            jnp.float32, -s2, s2)
    b2 = jax.random.uniform(k4, (in_chans,), jnp.float32, -s2, s2)

    # small time_tile so the test exercises multiple tiles, the ragged
    # (partial) boundary block, aligned halos, and both boundary masks
    out = multi_layered_conv1d(x, w1, b1, w2, b2, kernel_size, time_tile=8)
    out = jax.block_until_ready(out)

    ref = _reference(np.asarray(x), np.asarray(w1), np.asarray(b1),
                     np.asarray(w2), np.asarray(b2), kernel_size)
    np.testing.assert_allclose(np.asarray(out), ref, rtol=2e-3, atol=2e-3)
    assert out.shape == (B, T, in_chans)
    print("KERNEL_OK")
</pallas_src>

<mosaic_0001>
module attributes {stable_mosaic.version = 11 : i64} {
  func.func @_mlconv_kernel(%arg0: i32, %arg1: i32, %arg2: memref<1x8x128xbf16, #tpu.memory_space<vmem>>, %arg3: memref<1x1x16x128xbf16, #tpu.memory_space<vmem>>, %arg4: memref<384x128xbf16, #tpu.memory_space<vmem>>, %arg5: memref<1x128xf32, #tpu.memory_space<vmem>>, %arg6: memref<3x128x128xbf16, #tpu.memory_space<vmem>>, %arg7: memref<1x128xf32, #tpu.memory_space<vmem>>, %arg8: memref<1x8x128xf32, #tpu.memory_space<vmem>>) attributes {dimension_semantics = [#tpu.dimension_semantics<parallel>, #tpu.dimension_semantics<parallel>], iteration_bounds = array<i64: 2, 3>, scalar_prefetch = 0 : i64, scratch_operands = 0 : i64, tpu.core_type = #tpu.core_type<tc>, window_params = [{transform_indices = @transform_0, window_bounds = array<i64: 1, 8, 128>}, {transform_indices = @transform_1, window_bounds = array<i64: 1, 1, 16, 128>}, {pipeline_mode = #tpu.pipeline_mode<synchronous>, transform_indices = @transform_2, window_bounds = array<i64: 384, 128>}, {pipeline_mode = #tpu.pipeline_mode<synchronous>, transform_indices = @transform_3, window_bounds = array<i64: 1, 128>}, {pipeline_mode = #tpu.pipeline_mode<synchronous>, transform_indices = @transform_4, window_bounds = array<i64: 3, 128, 128>}, {pipeline_mode = #tpu.pipeline_mode<synchronous>, transform_indices = @transform_5, window_bounds = array<i64: 1, 128>}, {transform_indices = @transform_6, window_bounds = array<i64: 1, 8, 128>}]} {
    %c0 = arith.constant 0 : index
    %c0_0 = arith.constant 0 : index
    %c0_1 = arith.constant 0 : index
    %0 = vector.load %arg2[%c0, %c0_0, %c0_1] : memref<1x8x128xbf16, #tpu.memory_space<vmem>>, vector<1x8x128xbf16>
    %1 = vector.shape_cast %0 : vector<1x8x128xbf16> to vector<8x128xbf16>
    %c0_2 = arith.constant 0 : index
    %c0_3 = arith.constant 0 : index
    %c0_4 = arith.constant 0 : index
    %c0_5 = arith.constant 0 : index
    %2 = vector.load %arg3[%c0_2, %c0_3, %c0_4, %c0_5] : memref<1x1x16x128xbf16, #tpu.memory_space<vmem>>, vector<1x1x16x128xbf16>
    %3 = vector.shape_cast %2 : vector<1x1x16x128xbf16> to vector<16x128xbf16>
    %4 = vector.extract_strided_slice %3 {offsets = [0, 0], sizes = [8, 128], strides = [1, 1]} : vector<16x128xbf16> to vector<8x128xbf16>
    %5 = vector.extract_strided_slice %3 {offsets = [8, 0], sizes = [8, 128], strides = [1, 1]} : vector<16x128xbf16> to vector<8x128xbf16>
    %6 = tpu.concatenate %4, %1, %5 in 0 : vector<8x128xbf16>, vector<8x128xbf16>, vector<8x128xbf16> -> vector<24x128xbf16>
    %c8_i32 = arith.constant 8 : i32
    %7 = arith.muli %arg1, %c8_i32 : i32
    %c8_i32_6 = arith.constant 8 : i32
    %8 = arith.subi %7, %c8_i32_6 : i32
    %9 = tpu.iota {dimensions = array<i32: 0>} : vector<24x1xi32>
    %10 = vector.broadcast %8 : i32 to vector<24x1xi32>
    %11 = arith.addi %10, %9 : vector<24x1xi32>
    %c0_i32 = arith.constant 0 : i32
    %12 = vector.broadcast %c0_i32 : i32 to vector<24x1xi32>
    %13 = arith.cmpi sge, %11, %12 : vector<24x1xi32>
    %c20_i32 = arith.constant 20 : i32
    %14 = vector.broadcast %c20_i32 : i32 to vector<24x1xi32>
    %15 = arith.cmpi slt, %11, %14 : vector<24x1xi32>
    %16 = arith.andi %13, %15 : vector<24x1xi1>
    %cst = arith.constant 0.000000e+00 : bf16
    %17 = vector.shape_cast %16 : vector<24x1xi1> to vector<24x1xi1>
    %18 = vector.broadcast %17 : vector<24x1xi1> to vector<24x128xi1>
    %19 = vector.broadcast %cst : bf16 to vector<24x128xbf16>
    %20 = arith.select %18, %6, %19 : vector<24x128xi1>, vector<24x128xbf16>
    %21 = vector.extract_strided_slice %20 {offsets = [6, 0], sizes = [10, 128], strides = [1, 1]} : vector<24x128xbf16> to vector<10x128xbf16>
    %22 = vector.extract_strided_slice %20 {offsets = [7, 0], sizes = [10, 128], strides = [1, 1]} : vector<24x128xbf16> to vector<10x128xbf16>
    %23 = vector.extract_strided_slice %20 {offsets = [8, 0], sizes = [10, 128], strides = [1, 1]} : vector<24x128xbf16> to vector<10x128xbf16>
    %24 = tpu.concatenate %21, %22, %23 in 1 : vector<10x128xbf16>, vector<10x128xbf16>, vector<10x128xbf16> -> vector<10x384xbf16>
    %c0_7 = arith.constant 0 : index
    %c0_8 = arith.constant 0 : index
    %25 = vector.load %arg4[%c0_7, %c0_8] : memref<384x128xbf16, #tpu.memory_space<vmem>>, vector<384x128xbf16>
    %cst_9 = arith.constant dense<0.000000e+00> : vector<10x128xf32>
    %26 = tpu.matmul %24, %25, %cst_9 {dimension_numbers = #tpu.dot_dimension_numbers<[1], [0], [0], [1], [0, 0, 1, 1], [], []>} : vector<10x384xbf16>, vector<384x128xbf16>, vector<10x128xf32> -> vector<10x128xf32>
    %c0_10 = arith.constant 0 : index
    %c0_11 = arith.constant 0 : index
    %27 = vector.load %arg5[%c0_10, %c0_11] : memref<1x128xf32, #tpu.memory_space<vmem>>, vector<1x128xf32>
    %28 = vector.broadcast %27 : vector<1x128xf32> to vector<10x128xf32>
    %29 = arith.addf %26, %28 : vector<10x128xf32>
    %cst_12 = arith.constant 0.000000e+00 : f32
    %30 = vector.broadcast %cst_12 : f32 to vector<10x128xf32>
    %31 = arith.maximumf %29, %30 : vector<10x128xf32>
    %c1_i32 = arith.constant 1 : i32
    %32 = arith.subi %7, %c1_i32 : i32
    %33 = tpu.iota {dimensions = array<i32: 0>} : vector<10x1xi32>
    %34 = vector.broadcast %32 : i32 to vector<10x1xi32>
    %35 = arith.addi %34, %33 : vector<10x1xi32>
    %c0_i32_13 = arith.constant 0 : i32
    %36 = vector.broadcast %c0_i32_13 : i32 to vector<10x1xi32>
    %37 = arith.cmpi sge, %35, %36 : vector<10x1xi32>
    %c20_i32_14 = arith.constant 20 : i32
    %38 = vector.broadcast %c20_i32_14 : i32 to vector<10x1xi32>
    %39 = arith.cmpi slt, %35, %38 : vector<10x1xi32>
    %40 = arith.andi %37, %39 : vector<10x1xi1>
    %cst_15 = arith.constant 0.000000e+00 : f32
    %41 = vector.shape_cast %40 : vector<10x1xi1> to vector<10x1xi1>
    %42 = vector.broadcast %41 : vector<10x1xi1> to vector<10x128xi1>
    %43 = vector.broadcast %cst_15 : f32 to vector<10x128xf32>
    %44 = arith.select %42, %31, %43 : vector<10x128xi1>, vector<10x128xf32>
    %45 = arith.truncf %44 : vector<10x128xf32> to vector<10x128xbf16>
    %c0_16 = arith.constant 0 : index
    %c0_17 = arith.constant 0 : index
    %c0_18 = arith.constant 0 : index
    %46 = vector.load %arg6[%c0_16, %c0_17, %c0_18] : memref<3x128x128xbf16, #tpu.memory_space<vmem>>, vector<1x128x128xbf16>
    %47 = vector.shape_cast %46 : vector<1x128x128xbf16> to vector<128x128xbf16>
    %cst_19 = arith.constant dense<0.000000e+00> : vector<10x128xf32>
    %48 = tpu.matmul %45, %47, %cst_19 {dimension_numbers = #tpu.dot_dimension_numbers<[1], [0], [0], [1], [0, 0, 1, 1], [], []>} : vector<10x128xbf16>, vector<128x128xbf16>, vector<10x128xf32> -> vector<10x128xf32>
    %49 = vector.extract_strided_slice %48 {offsets = [0, 0], sizes = [8, 128], strides = [1, 1]} : vector<10x128xf32> to vector<8x128xf32>
    %c1 = arith.constant 1 : index
    %c0_20 = arith.constant 0 : index
    %c0_21 = arith.constant 0 : index
    %50 = vector.load %arg6[%c1, %c0_20, %c0_21] : memref<3x128x128xbf16, #tpu.memory_space<vmem>>, vector<1x128x128xbf16>
    %51 = vector.shape_cast %50 : vector<1x128x128xbf16> to vector<128x128xbf16>
    %cst_22 = arith.constant dense<0.000000e+00> : vector<10x128xf32>
    %52 = tpu.matmul %45, %51, %cst_22 {dimension_numbers = #tpu.dot_dimension_numbers<[1], [0], [0], [1], [0, 0, 1, 1], [], []>} : vector<10x128xbf16>, vector<128x128xbf16>, vector<10x128xf32> -> vector<10x128xf32>
    %53 = vector.extract_strided_slice %52 {offsets = [1, 0], sizes = [8, 128], strides = [1, 1]} : vector<10x128xf32> to vector<8x128xf32>
    %54 = arith.addf %49, %53 : vector<8x128xf32>
    %c2 = arith.constant 2 : index
    %c0_23 = arith.constant 0 : index
    %c0_24 = arith.constant 0 : index
    %55 = vector.load %arg6[%c2, %c0_23, %c0_24] : memref<3x128x128xbf16, #tpu.memory_space<vmem>>, vector<1x128x128xbf16>
    %56 = vector.shape_cast %55 : vector<1x128x128xbf16> to vector<128x128xbf16>
    %cst_25 = arith.constant dense<0.000000e+00> : vector<10x128xf32>
    %57 = tpu.matmul %45, %56, %cst_25 {dimension_numbers = #tpu.dot_dimension_numbers<[1], [0], [0], [1], [0, 0, 1, 1], [], []>} : vector<10x128xbf16>, vector<128x128xbf16>, vector<10x128xf32> -> vector<10x128xf32>
    %58 = vector.extract_strided_slice %57 {offsets = [2, 0], sizes = [8, 128], strides = [1, 1]} : vector<10x128xf32> to vector<8x128xf32>
    %59 = arith.addf %54, %58 : vector<8x128xf32>
    %c0_26 = arith.constant 0 : index
    %c0_27 = arith.constant 0 : index
    %60 = vector.load %arg7[%c0_26, %c0_27] : memref<1x128xf32, #tpu.memory_space<vmem>>, vector<1x128xf32>
    %61 = vector.broadcast %60 : vector<1x128xf32> to vector<8x128xf32>
    %62 = arith.addf %59, %61 : vector<8x128xf32>
    %c0_28 = arith.constant 0 : index
    %c0_29 = arith.constant 0 : index
    %c0_30 = arith.constant 0 : index
    %63 = vector.load %arg8[%c0_28, %c0_29, %c0_30] : memref<1x8x128xf32, #tpu.memory_space<vmem>>, vector<1x8x128xf32>
    %64 = vector.shape_cast %63 : vector<1x8x128xf32> to vector<8x128xf32>
    %65 = vector.shape_cast %62 : vector<8x128xf32> to vector<1x8x128xf32>
    tpu.vector_store %arg8[%c0_28, %c0_29, %c0_30], %65 {strides = array<i32>} : memref<1x8x128xf32, #tpu.memory_space<vmem>>, vector<1x8x128xf32>,
    return
  }
  func.func @transform_0(%arg0: i32, %arg1: i32) -> (i32, i32, i32) {
    %c0_i32 = arith.constant 0 : i32
    %c0_i32_0 = arith.constant 0 : i32
    return %arg0, %arg1, %c0_i32 : i32, i32, i32
  }
  func.func @transform_1(%arg0: i32, %arg1: i32) -> (i32, i32, i32, i32) {
    %c0_i32 = arith.constant 0 : i32
    %c0_i32_0 = arith.constant 0 : i32
    %c0_i32_1 = arith.constant 0 : i32
    return %arg0, %arg1, %c0_i32, %c0_i32_0 : i32, i32, i32, i32
  }
  func.func @transform_2(%arg0: i32, %arg1: i32) -> (i32, i32) {
    %c0_i32 = arith.constant 0 : i32
    %c0_i32_0 = arith.constant 0 : i32
    %c0_i32_1 = arith.constant 0 : i32
    return %c0_i32, %c0_i32_0 : i32, i32
  }
  func.func @transform_3(%arg0: i32, %arg1: i32) -> (i32, i32) {
    %c0_i32 = arith.constant 0 : i32
    %c0_i32_0 = arith.constant 0 : i32
    %c0_i32_1 = arith.constant 0 : i32
    return %c0_i32, %c0_i32_0 : i32, i32
  }
  func.func @transform_4(%arg0: i32, %arg1: i32) -> (i32, i32, i32) {
    %c0_i32 = arith.constant 0 : i32
    %c0_i32_0 = arith.constant 0 : i32
    %c0_i32_1 = arith.constant 0 : i32
    %c0_i32_2 = arith.constant 0 : i32
    return %c0_i32, %c0_i32_0, %c0_i32_1 : i32, i32, i32
  }
  func.func @transform_5(%arg0: i32, %arg1: i32) -> (i32, i32) {
    %c0_i32 = arith.constant 0 : i32
    %c0_i32_0 = arith.constant 0 : i32
    %c0_i32_1 = arith.constant 0 : i32
    return %c0_i32, %c0_i32_0 : i32, i32
  }
  func.func @transform_6(%arg0: i32, %arg1: i32) -> (i32, i32, i32) {
    %c0_i32 = arith.constant 0 : i32
    %c0_i32_0 = arith.constant 0 : i32
    return %arg0, %arg1, %c0_i32 : i32, i32, i32
  }
}

module attributes {stable_mosaic.version = 11 : i64} {
  func.func @_mlconv_kernel(%arg0: i32, %arg1: i32, %arg2: memref<1x8x128xbf16, #tpu.memory_space<vmem>>, %arg3: memref<1x1x16x128xbf16, #tpu.memory_space<vmem>>, %arg4: memref<384x128xbf16, #tpu.memory_space<vmem>>, %arg5: memref<1x128xf32, #tpu.memory_space<vmem>>, %arg6: memref<3x128x128xbf16, #tpu.memory_space<vmem>>, %arg7: memref<1x128xf32, #tpu.memory_space<vmem>>, %arg8: memref<1x8x128xf32, #tpu.memory_space<vmem>>) attributes {dimension_semantics = [#tpu.dimension_semantics<parallel>, #tpu.dimension_semantics<parallel>], iteration_bounds = array<i64: 2, 3>, scalar_prefetch = 0 : i64, scratch_operands = 0 : i64, tpu.core_type = #tpu.core_type<tc>, window_params = [{transform_indices = @transform_0, window_bounds = array<i64: 1, 8, 128>}, {transform_indices = @transform_1, window_bounds = array<i64: 1, 1, 16, 128>}, {pipeline_mode = #tpu.pipeline_mode<synchronous>, transform_indices = @transform_2, window_bounds = array<i64: 384, 128>}, {pipeline_mode = #tpu.pipeline_mode<synchronous>, transform_indices = @transform_3, window_bounds = array<i64: 1, 128>}, {pipeline_mode = #tpu.pipeline_mode<synchronous>, transform_indices = @transform_4, window_bounds = array<i64: 3, 128, 128>}, {pipeline_mode = #tpu.pipeline_mode<synchronous>, transform_indices = @transform_5, window_bounds = array<i64: 1, 128>}, {transform_indices = @transform_6, window_bounds = array<i64: 1, 8, 128>}]} {
    %c0 = arith.constant 0 : index
    %c0_0 = arith.constant 0 : index
    %c0_1 = arith.constant 0 : index
    %0 = vector.load %arg2[%c0, %c0_0, %c0_1] : memref<1x8x128xbf16, #tpu.memory_space<vmem>>, vector<1x8x128xbf16>
    %1 = vector.shape_cast %0 : vector<1x8x128xbf16> to vector<8x128xbf16>
    %c0_2 = arith.constant 0 : index
    %c0_3 = arith.constant 0 : index
    %c0_4 = arith.constant 0 : index
    %c0_5 = arith.constant 0 : index
    %2 = vector.load %arg3[%c0_2, %c0_3, %c0_4, %c0_5] : memref<1x1x16x128xbf16, #tpu.memory_space<vmem>>, vector<1x1x16x128xbf16>
    %3 = vector.shape_cast %2 : vector<1x1x16x128xbf16> to vector<16x128xbf16>
    %4 = vector.extract_strided_slice %3 {offsets = [0, 0], sizes = [8, 128], strides = [1, 1]} : vector<16x128xbf16> to vector<8x128xbf16>
    %5 = vector.extract_strided_slice %3 {offsets = [8, 0], sizes = [8, 128], strides = [1, 1]} : vector<16x128xbf16> to vector<8x128xbf16>
    %6 = tpu.concatenate %4, %1, %5 in 0 : vector<8x128xbf16>, vector<8x128xbf16>, vector<8x128xbf16> -> vector<24x128xbf16>
    %c8_i32 = arith.constant 8 : i32
    %7 = arith.muli %arg1, %c8_i32 : i32
    %c8_i32_6 = arith.constant 8 : i32
    %8 = arith.subi %7, %c8_i32_6 : i32
    %9 = tpu.iota {dimensions = array<i32: 0>} : vector<24x1xi32>
    %10 = vector.broadcast %8 : i32 to vector<24x1xi32>
    %11 = arith.addi %10, %9 : vector<24x1xi32>
    %c0_i32 = arith.constant 0 : i32
    %12 = vector.broadcast %c0_i32 : i32 to vector<24x1xi32>
    %13 = arith.cmpi sge, %11, %12 : vector<24x1xi32>
    %c20_i32 = arith.constant 20 : i32
    %14 = vector.broadcast %c20_i32 : i32 to vector<24x1xi32>
    %15 = arith.cmpi slt, %11, %14 : vector<24x1xi32>
    %16 = arith.andi %13, %15 : vector<24x1xi1>
    %cst = arith.constant 0.000000e+00 : bf16
    %17 = vector.shape_cast %16 : vector<24x1xi1> to vector<24x1xi1>
    %18 = vector.broadcast %17 : vector<24x1xi1> to vector<24x128xi1>
    %19 = vector.broadcast %cst : bf16 to vector<24x128xbf16>
    %20 = arith.select %18, %6, %19 : vector<24x128xi1>, vector<24x128xbf16>
    %21 = vector.extract_strided_slice %20 {offsets = [6, 0], sizes = [10, 128], strides = [1, 1]} : vector<24x128xbf16> to vector<10x128xbf16>
    %22 = vector.extract_strided_slice %20 {offsets = [7, 0], sizes = [10, 128], strides = [1, 1]} : vector<24x128xbf16> to vector<10x128xbf16>
    %23 = vector.extract_strided_slice %20 {offsets = [8, 0], sizes = [10, 128], strides = [1, 1]} : vector<24x128xbf16> to vector<10x128xbf16>
    %24 = tpu.concatenate %21, %22, %23 in 1 : vector<10x128xbf16>, vector<10x128xbf16>, vector<10x128xbf16> -> vector<10x384xbf16>
    %c0_7 = arith.constant 0 : index
    %c0_8 = arith.constant 0 : index
    %25 = vector.load %arg4[%c0_7, %c0_8] : memref<384x128xbf16, #tpu.memory_space<vmem>>, vector<384x128xbf16>
    %cst_9 = arith.constant dense<0.000000e+00> : vector<10x128xf32>
    %26 = tpu.matmul %24, %25, %cst_9 {dimension_numbers = #tpu.dot_dimension_numbers<[1], [0], [0], [1], [0, 0, 1, 1], [], []>} : vector<10x384xbf16>, vector<384x128xbf16>, vector<10x128xf32> -> vector<10x128xf32>
    %c0_10 = arith.constant 0 : index
    %c0_11 = arith.constant 0 : index
    %27 = vector.load %arg5[%c0_10, %c0_11] : memref<1x128xf32, #tpu.memory_space<vmem>>, vector<1x128xf32>
    %28 = vector.broadcast %27 : vector<1x128xf32> to vector<10x128xf32>
    %29 = arith.addf %26, %28 : vector<10x128xf32>
    %cst_12 = arith.constant 0.000000e+00 : f32
    %30 = vector.broadcast %cst_12 : f32 to vector<10x128xf32>
    %31 = arith.maximumf %29, %30 : vector<10x128xf32>
    %c1_i32 = arith.constant 1 : i32
    %32 = arith.subi %7, %c1_i32 : i32
    %33 = tpu.iota {dimensions = array<i32: 0>} : vector<10x1xi32>
    %34 = vector.broadcast %32 : i32 to vector<10x1xi32>
    %35 = arith.addi %34, %33 : vector<10x1xi32>
    %c0_i32_13 = arith.constant 0 : i32
    %36 = vector.broadcast %c0_i32_13 : i32 to vector<10x1xi32>
    %37 = arith.cmpi sge, %35, %36 : vector<10x1xi32>
    %c20_i32_14 = arith.constant 20 : i32
    %38 = vector.broadcast %c20_i32_14 : i32 to vector<10x1xi32>
    %39 = arith.cmpi slt, %35, %38 : vector<10x1xi32>
    %40 = arith.andi %37, %39 : vector<10x1xi1>
    %cst_15 = arith.constant 0.000000e+00 : f32
    %41 = vector.shape_cast %40 : vector<10x1xi1> to vector<10x1xi1>
    %42 = vector.broadcast %41 : vector<10x1xi1> to vector<10x128xi1>
    %43 = vector.broadcast %cst_15 : f32 to vector<10x128xf32>
    %44 = arith.select %42, %31, %43 : vector<10x128xi1>, vector<10x128xf32>
    %45 = arith.truncf %44 : vector<10x128xf32> to vector<10x128xbf16>
    %c0_16 = arith.constant 0 : index
    %c0_17 = arith.constant 0 : index
    %c0_18 = arith.constant 0 : index
    %46 = vector.load %arg6[%c0_16, %c0_17, %c0_18] : memref<3x128x128xbf16, #tpu.memory_space<vmem>>, vector<1x128x128xbf16>
    %47 = vector.shape_cast %46 : vector<1x128x128xbf16> to vector<128x128xbf16>
    %cst_19 = arith.constant dense<0.000000e+00> : vector<10x128xf32>
    %48 = tpu.matmul %45, %47, %cst_19 {dimension_numbers = #tpu.dot_dimension_numbers<[1], [0], [0], [1], [0, 0, 1, 1], [], []>} : vector<10x128xbf16>, vector<128x128xbf16>, vector<10x128xf32> -> vector<10x128xf32>
    %49 = vector.extract_strided_slice %48 {offsets = [0, 0], sizes = [8, 128], strides = [1, 1]} : vector<10x128xf32> to vector<8x128xf32>
    %c1 = arith.constant 1 : index
    %c0_20 = arith.constant 0 : index
    %c0_21 = arith.constant 0 : index
    %50 = vector.load %arg6[%c1, %c0_20, %c0_21] : memref<3x128x128xbf16, #tpu.memory_space<vmem>>, vector<1x128x128xbf16>
    %51 = vector.shape_cast %50 : vector<1x128x128xbf16> to vector<128x128xbf16>
    %cst_22 = arith.constant dense<0.000000e+00> : vector<10x128xf32>
    %52 = tpu.matmul %45, %51, %cst_22 {dimension_numbers = #tpu.dot_dimension_numbers<[1], [0], [0], [1], [0, 0, 1, 1], [], []>} : vector<10x128xbf16>, vector<128x128xbf16>, vector<10x128xf32> -> vector<10x128xf32>
    %53 = vector.extract_strided_slice %52 {offsets = [1, 0], sizes = [8, 128], strides = [1, 1]} : vector<10x128xf32> to vector<8x128xf32>
    %54 = arith.addf %49, %53 : vector<8x128xf32>
    %c2 = arith.constant 2 : index
    %c0_23 = arith.constant 0 : index
    %c0_24 = arith.constant 0 : index
    %55 = vector.load %arg6[%c2, %c0_23, %c0_24] : memref<3x128x128xbf16, #tpu.memory_space<vmem>>, vector<1x128x128xbf16>
    %56 = vector.shape_cast %55 : vector<1x128x128xbf16> to vector<128x128xbf16>
    %cst_25 = arith.constant dense<0.000000e+00> : vector<10x128xf32>
    %57 = tpu.matmul %45, %56, %cst_25 {dimension_numbers = #tpu.dot_dimension_numbers<[1], [0], [0], [1], [0, 0, 1, 1], [], []>} : vector<10x128xbf16>, vector<128x128xbf16>, vector<10x128xf32> -> vector<10x128xf32>
    %58 = vector.extract_strided_slice %57 {offsets = [2, 0], sizes = [8, 128], strides = [1, 1]} : vector<10x128xf32> to vector<8x128xf32>
    %59 = arith.addf %54, %58 : vector<8x128xf32>
    %c0_26 = arith.constant 0 : index
    %c0_27 = arith.constant 0 : index
    %60 = vector.load %arg7[%c0_26, %c0_27] : memref<1x128xf32, #tpu.memory_space<vmem>>, vector<1x128xf32>
    %61 = vector.broadcast %60 : vector<1x128xf32> to vector<8x128xf32>
    %62 = arith.addf %59, %61 : vector<8x128xf32>
    %c0_28 = arith.constant 0 : index
    %c0_29 = arith.constant 0 : index
    %c0_30 = arith.constant 0 : index
    %63 = vector.load %arg8[%c0_28, %c0_29, %c0_30] : memref<1x8x128xf32, #tpu.memory_space<vmem>>, vector<1x8x128xf32>
    %64 = vector.shape_cast %63 : vector<1x8x128xf32> to vector<8x128xf32>
    %65 = vector.shape_cast %62 : vector<8x128xf32> to vector<1x8x128xf32>
    tpu.vector_store %arg8[%c0_28, %c0_29, %c0_30], %65 {strides = array<i32>} : memref<1x8x128xf32, #tpu.memory_space<vmem>>, vector<1x8x128xf32>,
    return
  }
  func.func @transform_0(%arg0: i32, %arg1: i32) -> (i32, i32, i32) {
    %c0_i32 = arith.constant 0 : i32
    %c0_i32_0 = arith.constant 0 : i32
    return %arg0, %arg1, %c0_i32 : i32, i32, i32
  }
  func.func @transform_1(%arg0: i32, %arg1: i32) -> (i32, i32, i32, i32) {
    %c0_i32 = arith.constant 0 : i32
    %c0_i32_0 = arith.constant 0 : i32
    %c0_i32_1 = arith.constant 0 : i32
    return %arg0, %arg1, %c0_i32, %c0_i32_0 : i32, i32, i32, i32
  }
  func.func @transform_2(%arg0: i32, %arg1: i32) -> (i32, i32) {
    %c0_i32 = arith.constant 0 : i32
    %c0_i32_0 = arith.constant 0 : i32
    %c0_i32_1 = arith.constant 0 : i32
    return %c0_i32, %c0_i32_0 : i32, i32
  }
  func.func @transform_3(%arg0: i32, %arg1: i32) -> (i32, i32) {
    %c0_i32 = arith.constant 0 : i32
    %c0_i32_0 = arith.constant 0 : i32
    %c0_i32_1 = arith.constant 0 : i32
    return %c0_i32, %c0_i32_0 : i32, i32
  }
  func.func @transform_4(%arg0: i32, %arg1: i32) -> (i32, i32, i32) {
    %c0_i32 = arith.constant 0 : i32
    %c0_i32_0 = arith.constant 0 : i32
    %c0_i32_1 = arith.constant 0 : i32
    %c0_i32_2 = arith.constant 0 : i32
    return %c0_i32, %c0_i32_0, %c0_i32_1 : i32, i32, i32
  }
  func.func @transform_5(%arg0: i32, %arg1: i32) -> (i32, i32) {
    %c0_i32 = arith.constant 0 : i32
    %c0_i32_0 = arith.constant 0 : i32
    %c0_i32_1 = arith.constant 0 : i32
    return %c0_i32, %c0_i32_0 : i32, i32
  }
  func.func @transform_6(%arg0: i32, %arg1: i32) -> (i32, i32, i32) {
    %c0_i32 = arith.constant 0 : i32
    %c0_i32_0 = arith.constant 0 : i32
    return %arg0, %arg1, %c0_i32 : i32, i32, i32
  }
}

</mosaic_0001>

<llo_original>
// kernel: tpu_custom_call.1
$region0: #{tpu_custom_call.1}
  #allocation0 [shape = 'u32[]', space=smem, size = 0x4, offset = 0x4, fixed_abs, tag = 'smem constant byte address 0x4 - core index']
  #allocation1 [shape = 'u32[144,128]{1,0:T(1,128)}', space=vmem, size = 0x12000, scoped, tag = 'internal scratch']
  %s0 = inlined_call_operand.vmem [shape: bf16[2,20,128], index: 0, kind: input, shape index: {}]
  %s1 = inlined_call_operand.hbm [shape: bf16[2,3,16,128], index: 1, kind: input, shape index: {}]
  %s2 = inlined_call_operand.hbm [shape: bf16[384,128], index: 2, kind: input, shape index: {}]
  %s3 = inlined_call_operand.vmem [shape: f32[1,128], index: 3, kind: input, shape index: {}]
  %s4 = inlined_call_operand.hbm [shape: bf16[3,128,128], index: 4, kind: input, shape index: {}]
  %s5 = inlined_call_operand.vmem [shape: f32[1,128], index: 5, kind: input, shape index: {}]
  %s6 = inlined_call_operand.vmem [shape: f32[2,20,128], index: 6, kind: output, shape index: {}]
  %s7 = sld [smem:[#allocation0]]
  $region69: #{tpu_custom_call.1} parent=0
    _
  %s9 = ssub.s32 1, %s7
  %s10 = scalar_select 0, %s9, %s7
  $region1: #{tpu_custom_call.1} parent=0
    #allocation2 [shape = 'u8[8192]{0}', space=vmem, size = 0x2000, scoped, tag = 'input window, operand 1']
    #allocation3 [shape = 's32[2]{0}', space=sflag, size = 0x8, scoped, tag = 'scoped memory for tpu_custom_call.1']
    #allocation4 [shape = 'u8[98304]{0}', space=vmem, size = 0x18000, scoped, tag = 'input window, operand 2, single buffered']
    #allocation5 [shape = 's32[1]{0}', space=sflag, size = 0x4, scoped, tag = 'scoped memory for tpu_custom_call.1']
    #allocation6 [shape = 'u8[98304]{0}', space=vmem, size = 0x18000, scoped, tag = 'input window, operand 4, single buffered']
    %11 = vsyncpa [#allocation3], 0
    %s12 = scalar_lea.sflag [#allocation3], 1
    %13 = vsyncpa %s12, 0
    %14 = vsyncpa [#allocation5], 0
    loop: start=0, step=1, limit=8
    $region2: #{tpu_custom_call.1} parent=1 // loop_pre_header
      _
    $region3: #{tpu_custom_call.1} parent=1 // loop_header
      %s16 = sphi 0, %s20
      %p17 = scmp.ge.s32.totalorder %s16, 8
      %s23 = sphi 0, %s35
      %s24 = sphi 0, %s31
      %s25 = sphi 0, %s23
      %s26 = sphi 0, %s24
      %s27 = sphi 0, %s25
      %s28 = sphi 0, %s26
      %s40 = sphi 0, %s42
      %s43 = sphi 0, %s40
      %s44 = sphi 0, %s43
      %s60 = sphi 0, %s44
      %s68 = sphi 0, %s70
      %s71 = sphi 0, %s68
      %s72 = sphi 0, %s71
      %s88 = sphi 0, %s72
      %s92 = sphi 0, %s92
      %s94 = sphi 0, %s92
      %s95 = sphi 0, %s94
      %s109 = sphi 0, %s95
      %s113 = sphi 0, %s113
      %s115 = sphi 0, %s113
      %s116 = sphi 0, %s115
      %s130 = sphi 0, %s116
      %s134 = sphi 0, %s134
      %s136 = sphi 0, %s134
      %s137 = sphi 0, %s136
      %s151 = sphi 0, %s137
      %s155 = sphi 0, %s155
      %s157 = sphi 0, %s155
      %s158 = sphi 0, %s157
      %s172 = sphi 0, %s158
      %s180 = sphi 0, %s182
      %s183 = sphi 0, %s180
      %s184 = sphi 0, %s183
      %s200 = sphi 0, %s184
    $region4: #{tpu_custom_call.1} parent=1 // loop_header_branch
      %19 = sbr.rel (%p17) target = $region8
    $region5: #{tpu_custom_call.1} parent=1 // loop_body
      %s21 = ssub.s32 %s16, 1
      %s22 = ssub.s32 %s16, 2
      %s29 = sadd.s32 1, %s24
      %p30 = scmp.ge.s32.totalorder %s29, 3
      %s31 = scalar_select %p30, 0, %s29
      %s32 = sadd.s32 1, %s23
      %s33 = scalar_select %p30, %s32, %s23
      %p34 = scmp.ge.s32.totalorder %s33, 2
      %s35 = scalar_select %p34, 0, %s33
      %s36 = ssub.s32 %s23, %s35
      %s37 = ssub.s32 %s24, %s31
      %s38 = sor.u32 %s36, %s37
      %p39 = scmp.eq.s32.totalorder %s38, 0
      %s41 = sadd.s32 %s40, 1
      %s42 = scalar_select %p39, %s40, %s41
      %p45 = pneg %p39
      %p46 = scmp.eq.s32.totalorder %s16, 5
      %p47 = por %p45, %p46
      %p48 = scmp.ne.s32.totalorder %s40, %s43
      %p49 = scmp.eq.s32.totalorder %s16, 0
      %p50 = por %p48, %p49
      %p51 = scmp.ne.s32.totalorder %s40, %s43
      %p52 = scmp.eq.s32.totalorder %s21, 5
      %p53 = por %p51, %p52
      %p54 = scmp.ne.s32.totalorder %s43, %s44
      %p55 = scmp.eq.s32.totalorder %s21, 0
      %p56 = por %p54, %p55
      %p57 = scmp.ne.s32.totalorder %s43, %s44
      %p58 = scmp.eq.s32.totalorder %s22, 5
      %p59 = por %p57, %p58
      %p61 = scmp.ne.s32.totalorder %s44, %s60
      %p62 = scmp.eq.s32.totalorder %s22, 0
      %p63 = por %p61, %p62
      %s64 = ssub.s32 %s23, %s35
      %s65 = ssub.s32 %s24, %s31
      %s66 = sor.u32 %s64, %s65
      %p67 = scmp.eq.s32.totalorder %s66, 0
      %s69 = sadd.s32 %s68, 1
      %s70 = scalar_select %p67, %s68, %s69
      %p73 = pneg %p67
      %p74 = scmp.eq.s32.totalorder %s16, 5
      %p75 = por %p73, %p74
      %p76 = scmp.ne.s32.totalorder %s68, %s71
      %p77 = scmp.eq.s32.totalorder %s16, 0
      %p78 = por %p76, %p77
      %p79 = scmp.ne.s32.totalorder %s68, %s71
      %p80 = scmp.eq.s32.totalorder %s21, 5
      %p81 = por %p79, %p80
      %p82 = scmp.ne.s32.totalorder %s71, %s72
      %p83 = scmp.eq.s32.totalorder %s21, 0
      %p84 = por %p82, %p83
      %p85 = scmp.ne.s32.totalorder %s71, %s72
      %p86 = scmp.eq.s32.totalorder %s22, 5
      %p87 = por %p85, %p86
      %p89 = scmp.ne.s32.totalorder %s72, %s88
      %p90 = scmp.eq.s32.totalorder %s22, 0
      %p91 = por %p89, %p90
      %s93 = sadd.s32 %s92, 1
      %p96 = scmp.eq.s32.totalorder %s16, 5
      %p97 = scmp.ne.s32.totalorder %s92, %s94
      %p98 = scmp.eq.s32.totalorder %s16, 0
      %p99 = por %p97, %p98
      %p100 = scmp.ne.s32.totalorder %s92, %s94
      %p101 = scmp.eq.s32.totalorder %s21, 5
      %p102 = por %p100, %p101
      %p103 = scmp.ne.s32.totalorder %s94, %s95
      %p104 = scmp.eq.s32.totalorder %s21, 0
      %p105 = por %p103, %p104
      %p106 = scmp.ne.s32.totalorder %s94, %s95
      %p107 = scmp.eq.s32.totalorder %s22, 5
      %p108 = por %p106, %p107
      %p110 = scmp.ne.s32.totalorder %s95, %s109
      %p111 = scmp.eq.s32.totalorder %s22, 0
      %p112 = por %p110, %p111
      %s114 = sadd.s32 %s113, 1
      %p117 = scmp.eq.s32.totalorder %s16, 5
      %p118 = scmp.ne.s32.totalorder %s113, %s115
      %p119 = scmp.eq.s32.totalorder %s16, 0
      %p120 = por %p118, %p119
      %p121 = scmp.ne.s32.totalorder %s113, %s115
      %p122 = scmp.eq.s32.totalorder %s21, 5
      %p123 = por %p121, %p122
      %p124 = scmp.ne.s32.totalorder %s115, %s116
      %p125 = scmp.eq.s32.totalorder %s21, 0
      %p126 = por %p124, %p125
      %p127 = scmp.ne.s32.totalorder %s115, %s116
      %p128 = scmp.eq.s32.totalorder %s22, 5
      %p129 = por %p127, %p128
      %p131 = scmp.ne.s32.totalorder %s116, %s130
      %p132 = scmp.eq.s32.totalorder %s22, 0
      %p133 = por %p131, %p132
      %s135 = sadd.s32 %s134, 1
      %p138 = scmp.eq.s32.totalorder %s16, 5
      %p139 = scmp.ne.s32.totalorder %s134, %s136
      %p140 = scmp.eq.s32.totalorder %s16, 0
      %p141 = por %p139, %p140
      %p142 = scmp.ne.s32.totalorder %s134, %s136
      %p143 = scmp.eq.s32.totalorder %s21, 5
      %p144 = por %p142, %p143
      %p145 = scmp.ne.s32.totalorder %s136, %s137
      %p146 = scmp.eq.s32.totalorder %s21, 0
      %p147 = por %p145, %p146
      %p148 = scmp.ne.s32.totalorder %s136, %s137
      %p149 = scmp.eq.s32.totalorder %s22, 5
      %p150 = por %p148, %p149
      %p152 = scmp.ne.s32.totalorder %s137, %s151
      %p153 = scmp.eq.s32.totalorder %s22, 0
      %p154 = por %p152, %p153
      %s156 = sadd.s32 %s155, 1
      %p159 = scmp.eq.s32.totalorder %s16, 5
      %p160 = scmp.ne.s32.totalorder %s155, %s157
      %p161 = scmp.eq.s32.totalorder %s16, 0
      %p162 = por %p160, %p161
      %p163 = scmp.ne.s32.totalorder %s155, %s157
      %p164 = scmp.eq.s32.totalorder %s21, 5
      %p165 = por %p163, %p164
      %p166 = scmp.ne.s32.totalorder %s157, %s158
      %p167 = scmp.eq.s32.totalorder %s21, 0
      %p168 = por %p166, %p167
      %p169 = scmp.ne.s32.totalorder %s157, %s158
      %p170 = scmp.eq.s32.totalorder %s22, 5
      %p171 = por %p169, %p170
      %p173 = scmp.ne.s32.totalorder %s158, %s172
      %p174 = scmp.eq.s32.totalorder %s22, 0
      %p175 = por %p173, %p174
      %s176 = ssub.s32 %s23, %s35
      %s177 = ssub.s32 %s24, %s31
      %s178 = sor.u32 %s176, %s177
      %p179 = scmp.eq.s32.totalorder %s178, 0
      %s181 = sadd.s32 %s180, 1
      %s182 = scalar_select %p179, %s180, %s181
      %p185 = pneg %p179
      %p186 = scmp.eq.s32.totalorder %s16, 5
      %p187 = por %p185, %p186
      %p188 = scmp.ne.s32.totalorder %s180, %s183
      %p189 = scmp.eq.s32.totalorder %s16, 0
      %p190 = por %p188, %p189
      %p191 = scmp.ne.s32.totalorder %s180, %s183
      %p192 = scmp.eq.s32.totalorder %s21, 5
      %p193 = por %p191, %p192
      %p194 = scmp.ne.s32.totalorder %s183, %s184
      %p195 = scmp.eq.s32.totalorder %s21, 0
      %p196 = por %p194, %p195
      %p197 = scmp.ne.s32.totalorder %s183, %s184
      %p198 = scmp.eq.s32.totalorder %s22, 5
      %p199 = por %p197, %p198
      %p201 = scmp.ne.s32.totalorder %s184, %s200
      %p202 = scmp.eq.s32.totalorder %s22, 0
      %p203 = por %p201, %p202
      %p204 = scmp.le.s32.totalorder 1, %s16
      %p205 = scmp.lt.s32.totalorder %s16, 7
      %p206 = pnand %p204, %p205
      %p207 = pneg %p206
      // Predicated region
      $region9: #{tpu_custom_call.1} parent=5 // pred_check
        _
      $region10: #{tpu_custom_call.1} parent=5 // pred_check_branch
        %209 = sbr.rel (%p206) target = $region12
      $region11: #{tpu_custom_call.1} parent=5 // pred_region
        %s210 = ssub.s32 %s16, 1
        // Predicated region
        $region13: #{tpu_custom_call.1} parent=11 // pred_check
          %p211 = pneg %p105
        $region14: #{tpu_custom_call.1} parent=11 // pred_check_branch
          %213 = sbr.rel (%p211) target = $region16
        $region15: #{tpu_custom_call.1} parent=11 // pred_region
          %s215 = ssub.s32 3072, 3072
          %216 = vsyncadd [#allocation5], %s215
          %s217 = sshll.u32 [#allocation4], 4
          %s218 = int_to_ptr.vmem [resolvable:$true] %s217
          %223 = dma.hbm_to_vmem [thread:$0]  %s2, 3072, %s218, [#allocation5], 64, 64, 4
        $region16: #{tpu_custom_call.1} parent=11 // pred_fallthru
          _
        // Predicated region
        $region17: #{tpu_custom_call.1} parent=11 // pred_check
          %p224 = pneg %p126
        $region18: #{tpu_custom_call.1} parent=11 // pred_check_branch
          %226 = sbr.rel (%p224) target = $region20
        $region19: #{tpu_custom_call.1} parent=11 // pred_region
          _
        $region20: #{tpu_custom_call.1} parent=11 // pred_fallthru
          _
        // Predicated region
        $region21: #{tpu_custom_call.1} parent=11 // pred_check
          %p227 = pneg %p147
        $region22: #{tpu_custom_call.1} parent=11 // pred_check_branch
          %229 = sbr.rel (%p227) target = $region24
        $region23: #{tpu_custom_call.1} parent=11 // pred_region
          %s231 = ssub.s32 3072, 3072
          %232 = vsyncadd [#allocation5], %s231
          %s233 = sshll.u32 [#allocation6], 4
          %s234 = int_to_ptr.vmem [resolvable:$true] %s233
          %239 = dma.hbm_to_vmem [thread:$0]  %s4, 3072, %s234, [#allocation5], 64, 64, 4
        $region24: #{tpu_custom_call.1} parent=11 // pred_fallthru
          _
        // Predicated region
        $region25: #{tpu_custom_call.1} parent=11 // pred_check
          %p240 = pneg %p168
        $region26: #{tpu_custom_call.1} parent=11 // pred_check_branch
          %242 = sbr.rel (%p240) target = $region28
        $region27: #{tpu_custom_call.1} parent=11 // pred_region
          _
        $region28: #{tpu_custom_call.1} parent=11 // pred_fallthru
          _
      $region12: #{tpu_custom_call.1} parent=5 // pred_fallthru
        _
      %p243 = scmp.lt.s32.totalorder %s16, 6
      // Predicated region
      $region29: #{tpu_custom_call.1} parent=5 // pred_check
        %p244 = pneg %p243
      $region30: #{tpu_custom_call.1} parent=5 // pred_check_branch
        %246 = sbr.rel (%p244) target = $region32
      $region31: #{tpu_custom_call.1} parent=5 // pred_region
        // Predicated region
        $region33: #{tpu_custom_call.1} parent=31 // pred_check
          %p247 = pneg %p50
        $region34: #{tpu_custom_call.1} parent=31 // pred_check_branch
          %249 = sbr.rel (%p247) target = $region36
        $region35: #{tpu_custom_call.1} parent=31 // pred_region
          %p250 = scmp.lt.s32.totalorder %s23, 1
          %s251 = scalar_select %p250, %s23, 1
          %p252 = scmp.lt.s32.totalorder %s24, 2
          %s253 = scalar_select %p252, %s24, 2
          %s254 = smul.addr %s251, 3
          %s255 = sadd.s32 %s253, %s254
          %s256 = smul.addr %s255, 4
          %s257 = scalar_lea.vmem %s0, %s256
        $region36: #{tpu_custom_call.1} parent=31 // pred_fallthru
          _
        // Predicated region
        $region37: #{tpu_custom_call.1} parent=31 // pred_check
          %p258 = pneg %p78
        $region38: #{tpu_custom_call.1} parent=31 // pred_check_branch
          %260 = sbr.rel (%p258) target = $region40
        $region39: #{tpu_custom_call.1} parent=31 // pred_region
          %s261 = sand.u32 %s68, 1
          %s262 = scalar_lea.sflag [#allocation3], %s261
          %s263 = sand.u32 %s68, 1
          %s264 = smul.addr %s263, 8
          %s265 = scalar_lea.vmem [#allocation2], %s264
          %s267 = ssub.s32 128, 128
          %268 = vsyncadd %s262, %s267
          %s269 = smul.addr %s24, 2
          %s270 = smul.addr %s23, 6
          %s271 = sadd.s32 %s269, %s270
          %s272 = smul.addr %s271, 64
          %s273 = scalar_lea.hbm %s1, %s272
          %s274 = sshll.u32 %s265, 4
          %s275 = int_to_ptr.vmem [resolvable:$true] %s274
          %280 = dma.hbm_to_vmem [thread:$0]  %s273, 128, %s275, %s262, 64, 64, 4
        $region40: #{tpu_custom_call.1} parent=31 // pred_fallthru
          _
      $region32: #{tpu_custom_call.1} parent=5 // pred_fallthru
        _
      %p281 = scmp.le.s32.totalorder 1, %s16
      %p282 = scmp.lt.s32.totalorder %s16, 7
      %p283 = pnand %p281, %p282
      %p284 = pneg %p283
      // Predicated region
      $region41: #{tpu_custom_call.1} parent=5 // pred_check
        _
      $region42: #{tpu_custom_call.1} parent=5 // pred_check_branch
        %286 = sbr.rel (%p283) target = $region44
      $region43: #{tpu_custom_call.1} parent=5 // pred_region
        %s287 = ssub.s32 %s16, 1
        %s288 = sand.u32 %s71, 1
        %s289 = scalar_lea.sflag [#allocation3], %s288
        %s290 = sand.u32 %s71, 1
        %s291 = smul.addr %s290, 8
        %s292 = scalar_lea.vmem [#allocation2], %s291
        // Predicated region
        $region45: #{tpu_custom_call.1} parent=43 // pred_check
          %p293 = pneg %p84
        $region46: #{tpu_custom_call.1} parent=43 // pred_check_branch
          %295 = sbr.rel (%p293) target = $region48
        $region47: #{tpu_custom_call.1} parent=43 // pred_region
          %296 = dma.done %s289, 128
        $region48: #{tpu_custom_call.1} parent=43 // pred_fallthru
          _
        // Predicated region
        $region49: #{tpu_custom_call.1} parent=43 // pred_check
          %p297 = pneg %p105
        $region50: #{tpu_custom_call.1} parent=43 // pred_check_branch
          %299 = sbr.rel (%p297) target = $region52
        $region51: #{tpu_custom_call.1} parent=43 // pred_region
          %300 = dma.done [#allocation5], 3072
        $region52: #{tpu_custom_call.1} parent=43 // pred_fallthru
          _
        // Predicated region
        $region53: #{tpu_custom_call.1} parent=43 // pred_check
          %p301 = pneg %p147
        $region54: #{tpu_custom_call.1} parent=43 // pred_check_branch
          %303 = sbr.rel (%p301) target = $region56
        $region55: #{tpu_custom_call.1} parent=43 // pred_region
          %304 = dma.done [#allocation5], 3072
        $region56: #{tpu_custom_call.1} parent=43 // pred_fallthru
          _
        %p305 = scmp.lt.s32.totalorder %s25, 1
        %s306 = scalar_select %p305, %s25, 1
        %p307 = scmp.lt.s32.totalorder %s26, 2
        %s308 = scalar_select %p307, %s26, 2
        %s309 = smul.addr %s306, 3
        %s310 = sadd.s32 %s308, %s309
        %s311 = smul.addr %s310, 4
        %s312 = scalar_lea.vmem %s0, %s311
        %p313 = pneg %p56
        %p314 = pneg %p53
        %s315 = sand.u32 %s71, 1
        %s316 = scalar_lea.sflag [#allocation3], %s315
        %s317 = sand.u32 %s71, 1
        %s318 = smul.addr %s317, 8
        %s319 = scalar_lea.vmem [#allocation2], %s318
        %p320 = pneg %p84
        %p321 = pneg %p81
        %p322 = pneg %p105
        %p323 = pneg %p102
        %p324 = pneg %p126
        %p325 = pneg %p123
        %p326 = pneg %p147
        %p327 = pneg %p144
        %p328 = pneg %p168
        %p329 = pneg %p165
        %p330 = pneg %p196
        %p331 = pneg %p193
        %p332 = scmp.lt.s32.totalorder %s25, 1
        %s333 = scalar_select %p332, %s25, 1
        %p334 = scmp.lt.s32.totalorder %s26, 2
        %s335 = scalar_select %p334, %s26, 2
        %s336 = smul.addr %s333, 3
        %s337 = sadd.s32 %s335, %s336
        %s338 = smul.addr %s337, 8
        %s339 = scalar_lea.vmem %s6, %s338
        %p340 = scmp.lt.s32.totalorder %s25, 1
        %s341 = scalar_select %p340, %s25, 1
        %p342 = scmp.lt.s32.totalorder %s26, 2
        %s343 = scalar_select %p342, %s26, 2
        %s344 = smul.addr %s341, 3
        %s345 = sadd.s32 %s343, %s344
        %s346 = smul.addr %s345, 4
        %s347 = scalar_lea.vmem %s0, %s346
        %p348 = scmp.lt.s32.totalorder %s25, 1
        %s349 = scalar_select %p348, %s25, 1
        %p350 = scmp.lt.s32.totalorder %s26, 2
        %s351 = scalar_select %p350, %s26, 2
        %s352 = smul.addr %s349, 3
        %s353 = sadd.s32 %s351, %s352
        %s354 = smul.addr %s353, 8
        %s355 = scalar_lea.vmem %s6, %s354
        %v359 = vld [vmem:[%s347] sm:$0xf]
        %v360 = vld [vmem:[%s292] sm:$0xf]
        %v361 = vld [vmem:[%s292 + $0x4] sm:$0xf]
        %v363 = vunpack.c.l.b16 %v359
        %v364 = vpack.c.b16 %v363, %v363
        %vm365 = vcmask 1043456
        %v368 = vsel %vm365, %v360, %v364
        %s370 = smul.u32 %s26, 8
        %s371 = ssub.s32 %s370, 8
        %v372 = vlaneseq
        %v373 = vshrl.u32 %v372, 7
        %v374 = vadd.s32 %v373, 8
        %v375 = vadd.s32 %v373, 16
        %v376 = vstv %s371
        %v377 = vadd.s32 %v376, %v373
        %v378 = vadd.s32 %v376, %v374
        %v379 = vadd.s32 %v376, %v375
        %vm380 = vcmp.ge.s32.totalorder %v377, 0
        %vm381 = vcmp.ge.s32.totalorder %v378, 0
        %vm382 = vcmp.ge.s32.totalorder %v379, 0
        %vm383 = vcmp.lt.s32.totalorder %v377, 20
        %vm384 = vcmp.lt.s32.totalorder %v378, 20
        %vm385 = vcmp.lt.s32.totalorder %v379, 20
        %vm386 = vmand %vm380, %vm383
        %vm387 = vmand %vm381, %vm384
        %vm388 = vmand %vm382, %vm385
        %v389 = vsel %vm386, 1, 0
        %v390 = vsel %vm387, 1, 0
        %v391 = vsel %vm388, 1, 0
        %vm392 = vcmp.eq.s32.totalorder %v389, 1
        %vm393 = vcmp.eq.s32.totalorder %v390, 1
        %vm394 = vcmp.eq.s32.totalorder %v391, 1
        %vm395 = vmpackc.low %vm392, %vm392
        %vm396 = vmpackc.low %vm393, %vm393
        %vm397 = vmpackc.low %vm394, %vm394
        %v398 = vsel %vm395, 65537, 0
        %v399 = vsel %vm396, 65537, 0
        %v400 = vsel %vm397, 65537, 0
        %v401 = vunpack.c.l.b16 %v398
        %v402 = vunpack.c.l.b16 %v399
        %v403 = vunpack.c.l.b16 %v400
        %v404 = vpack.c.b16 %v402, %v401
        %v405 = vpack.c.b16 %v403, %v403
        %vm406 = vcmp.ne.s16.totalorder %v404, 0
        %vm407 = vcmp.ne.s16.totalorder %v405, 0
        %v408 = vsel %vm406, %v368, 0
        %v409 = vsel %vm407, %v361, 0
        %vm410 = vsmask.f32 7424
        %v412 = vshrl.u32 %v408, 16
        %v414 = vshll.u32 %v408, 16
        %v416 = vrot.slane %v414, 1
        %v417 = vor.u32 %v412, %v416
        %v419 = vshll.u32 %v409, 16
        %v421 = vrot.slane %v419, 1
        %v422 = vsel %vm410, %v417, %v421
        %vm425 = vcmask 1046528
        %v426 = vrot.slane %v408, 1
        %v427 = vrot.slane %v409, 1
        %v428 = vsel %vm425, %v426, %v427
        %v429 = vld [vmem:[#allocation4] sm:$0xf]
        %v430 = vld [vmem:[#allocation4 + $0x4] sm:$0xf]
        %v431 = vld [vmem:[#allocation4 + $0x8] sm:$0xf]
        %v432 = vld [vmem:[#allocation4 + $0xc] sm:$0xf]
        %v433 = vld [vmem:[#allocation4 + $0x10] sm:$0xf]
        %v434 = vld [vmem:[#allocation4 + $0x14] sm:$0xf]
        %v435 = vld [vmem:[#allocation4 + $0x18] sm:$0xf]
        %v436 = vld [vmem:[#allocation4 + $0x1c] sm:$0xf]
        %v437 = vld [vmem:[#allocation4 + $0x20] sm:$0xf]
        %v438 = vld [vmem:[#allocation4 + $0x24] sm:$0xf]
        %v439 = vld [vmem:[#allocation4 + $0x28] sm:$0xf]
        %v440 = vld [vmem:[#allocation4 + $0x2c] sm:$0xf]
        %v441 = vld [vmem:[#allocation4 + $0x30] sm:$0xf]
        %v442 = vld [vmem:[#allocation4 + $0x34] sm:$0xf]
        %v443 = vld [vmem:[#allocation4 + $0x38] sm:$0xf]
        %v444 = vld [vmem:[#allocation4 + $0x3c] sm:$0xf]
        %v445 = vld [vmem:[#allocation4 + $0x40] sm:$0xf]
        %v446 = vld [vmem:[#allocation4 + $0x44] sm:$0xf]
        %v447 = vld [vmem:[#allocation4 + $0x48] sm:$0xf]
        %v448 = vld [vmem:[#allocation4 + $0x4c] sm:$0xf]
        %v449 = vld [vmem:[#allocation4 + $0x50] sm:$0xf]
        %v450 = vld [vmem:[#allocation4 + $0x54] sm:$0xf]
        %v451 = vld [vmem:[#allocation4 + $0x58] sm:$0xf]
        %v452 = vld [vmem:[#allocation4 + $0x5c] sm:$0xf]
        %v453 = vld [vmem:[#allocation4 + $0x60] sm:$0xf]
        %v454 = vld [vmem:[#allocation4 + $0x64] sm:$0xf]
        %v455 = vld [vmem:[#allocation4 + $0x68] sm:$0xf]
        %v456 = vld [vmem:[#allocation4 + $0x6c] sm:$0xf]
        %v457 = vld [vmem:[#allocation4 + $0x70] sm:$0xf]
        %v458 = vld [vmem:[#allocation4 + $0x74] sm:$0xf]
        %v459 = vld [vmem:[#allocation4 + $0x78] sm:$0xf]
        %v460 = vld [vmem:[#allocation4 + $0x7c] sm:$0xf]
        %v461 = vld [vmem:[#allocation4 + $0x80] sm:$0xf]
        %v462 = vld [vmem:[#allocation4 + $0x84] sm:$0xf]
        %v463 = vld [vmem:[#allocation4 + $0x88] sm:$0xf]
        %v464 = vld [vmem:[#allocation4 + $0x8c] sm:$0xf]
        %v465 = vld [vmem:[#allocation4 + $0x90] sm:$0xf]
        %v466 = vld [vmem:[#allocation4 + $0x94] sm:$0xf]
        %v467 = vld [vmem:[#allocation4 + $0x98] sm:$0xf]
        %v468 = vld [vmem:[#allocation4 + $0x9c] sm:$0xf]
        %v469 = vld [vmem:[#allocation4 + $0xa0] sm:$0xf]
        %v470 = vld [vmem:[#allocation4 + $0xa4] sm:$0xf]
        %v471 = vld [vmem:[#allocation4 + $0xa8] sm:$0xf]
        %v472 = vld [vmem:[#allocation4 + $0xac] sm:$0xf]
        %v473 = vld [vmem:[#allocation4 + $0xb0] sm:$0xf]
        %v474 = vld [vmem:[#allocation4 + $0xb4] sm:$0xf]
        %v475 = vld [vmem:[#allocation4 + $0xb8] sm:$0xf]
        %v476 = vld [vmem:[#allocation4 + $0xbc] sm:$0xf]
        %v477 = vld [vmem:[%s3] sm:$0x1]
        %v479 = vlaneseq
        %v480 = vshrl.u32 %v479, 7
        %v481 = vsub.s32 0, %v480
        %v482 = vrot.slane %v477, %v481
        %v484 = vrot.slane %v408, 3
        %v485 = vrot.slane %v422, 3
        %v486 = vrot.slane %v428, 3
        %v538 = vunpack.c.l.b16 %v429
        %v539 = vunpack.c.l.b16 %v430
        %v540 = vunpack.c.l.b16 %v431
        %v541 = vunpack.c.l.b16 %v432
        %v542 = vunpack.c.l.b16 %v433
        %v543 = vunpack.c.l.b16 %v434
        %v544 = vunpack.c.l.b16 %v435
        %v545 = vunpack.c.l.b16 %v436
        %v546 = vunpack.c.l.b16 %v437
        %v547 = vunpack.c.l.b16 %v438
        %v548 = vunpack.c.l.b16 %v439
        %v549 = vunpack.c.l.b16 %v440
        %v550 = vunpack.c.l.b16 %v441
        %v551 = vunpack.c.l.b16 %v442
        %v552 = vunpack.c.l.b16 %v443
        %v553 = vunpack.c.l.b16 %v444
        %v554 = vunpack.c.l.b16 %v445
        %v555 = vunpack.c.l.b16 %v446
        %v556 = vunpack.c.l.b16 %v447
        %v557 = vunpack.c.l.b16 %v448
        %v558 = vunpack.c.l.b16 %v449
        %v559 = vunpack.c.l.b16 %v450
        %v560 = vunpack.c.l.b16 %v451
        %v561 = vunpack.c.l.b16 %v452
        %v562 = vunpack.c.l.b16 %v453
        %v563 = vunpack.c.l.b16 %v454
        %v564 = vunpack.c.l.b16 %v455
        %v565 = vunpack.c.l.b16 %v456
        %v566 = vunpack.c.l.b16 %v457
        %v567 = vunpack.c.l.b16 %v458
        %v568 = vunpack.c.l.b16 %v459
        %v569 = vunpack.c.l.b16 %v460
        %v570 = vunpack.c.l.b16 %v461
        %v571 = vunpack.c.l.b16 %v462
        %v572 = vunpack.c.l.b16 %v463
        %v573 = vunpack.c.l.b16 %v464
        %v574 = vunpack.c.l.b16 %v465
        %v575 = vunpack.c.l.b16 %v466
        %v576 = vunpack.c.l.b16 %v467
        %v577 = vunpack.c.l.b16 %v468
        %v578 = vunpack.c.l.b16 %v469
        %v579 = vunpack.c.l.b16 %v470
        %v580 = vunpack.c.l.b16 %v471
        %v581 = vunpack.c.l.b16 %v472
        %v582 = vunpack.c.l.b16 %v473
        %v583 = vunpack.c.l.b16 %v474
        %v584 = vunpack.c.l.b16 %v475
        %v585 = vunpack.c.l.b16 %v476
        %v586 = vpack.c.b16 %v539, %v538
        %v587 = vpack.c.b16 %v541, %v540
        %v588 = vpack.c.b16 %v543, %v542
        %v589 = vpack.c.b16 %v545, %v544
        %v590 = vpack.c.b16 %v547, %v546
        %v591 = vpack.c.b16 %v549, %v548
        %v592 = vpack.c.b16 %v551, %v550
        %v593 = vpack.c.b16 %v553, %v552
        %v594 = vpack.c.b16 %v555, %v554
        %v595 = vpack.c.b16 %v557, %v556
        %v596 = vpack.c.b16 %v559, %v558
        %v597 = vpack.c.b16 %v561, %v560
        %v598 = vpack.c.b16 %v563, %v562
        %v599 = vpack.c.b16 %v565, %v564
        %v600 = vpack.c.b16 %v567, %v566
        %v601 = vpack.c.b16 %v569, %v568
        %v602 = vpack.c.b16 %v571, %v570
        %v603 = vpack.c.b16 %v573, %v572
        %v604 = vpack.c.b16 %v575, %v574
        %v605 = vpack.c.b16 %v577, %v576
        %v606 = vpack.c.b16 %v579, %v578
        %v607 = vpack.c.b16 %v581, %v580
        %v608 = vpack.c.b16 %v583, %v582
        %v609 = vpack.c.b16 %v585, %v584
        %634 = vmatprep.subr.bf16.mxu0 0
        %635 = vmatpush1.bf16.msra.mxu0 %v593
        %636 = vmatprep.subr.bf16.mxu0 0
        %637 = vmatpush1.bf16.msra.mxu0 %v592
        %638 = vmatprep.subr.bf16.mxu0 0
        %639 = vmatpush1.bf16.msra.mxu0 %v591
        %640 = vmatprep.subr.bf16.mxu0 0
        %641 = vmatpush1.bf16.msra.mxu0 %v590
        %642 = vmatprep.subr.bf16.mxu0 0
        %643 = vmatpush1.bf16.msra.mxu0 %v589
        %644 = vmatprep.subr.bf16.mxu0 0
        %645 = vmatpush1.bf16.msra.mxu0 %v588
        %646 = vmatprep.subr.bf16.mxu0 0
        %647 = vmatpush1.bf16.msra.mxu0 %v587
        %648 = vmatprep.subr.bf16.mxu0 0
        %649 = vmatpush1.bf16.msra.mxu0 %v586
        %650 = vmatprep.subr.bf16.mxu0 0
        %651 = vmatpush2.bf16.msra.mxu0 %v601
        %652 = vmatprep.subr.bf16.mxu0 0
        %653 = vmatpush2.bf16.msra.mxu0 %v600
        %654 = vmatprep.subr.bf16.mxu0 0
        %655 = vmatpush2.bf16.msra.mxu0 %v599
        %656 = vmatprep.subr.bf16.mxu0 0
        %657 = vmatpush2.bf16.msra.mxu0 %v598
        %658 = vmatprep.subr.bf16.mxu0 0
        %659 = vmatpush2.bf16.msra.mxu0 %v597
        %660 = vmatprep.subr.bf16.mxu0 0
        %661 = vmatpush2.bf16.msra.mxu0 %v596
        %662 = vmatprep.subr.bf16.mxu0 0
        %663 = vmatpush2.bf16.msra.mxu0 %v595
        %664 = vmatprep.subr.bf16.mxu0 0
        %665 = vmatpush2.bf16.msra.mxu0 %v594
        %666 = vmatprep.mubr.bf16.mxu0 %v485
        %667 = vmatmul.mubr.bf16.gmra.mxu0 %v484
        %v668 = vpop.f32.mrf.mxu0
        %v669 = vadd.f32 %v482, %v668
        %v670 = vpop.f32.mrf.mxu0
        %v671 = vpop.f32.mrf.mxu0
        %v672 = vadd.f32 %v482, %v671
        %v673 = vpop.f32.mrf.mxu0
        %674 = vdwg.mxu0
        %675 = vmatprep.subr.bf16.mxu0 0
        %676 = vmatpush1.bf16.msra.mxu0 %v609
        %677 = vmatprep.subr.bf16.mxu0 0
        %678 = vmatpush1.bf16.msra.mxu0 %v608
        %679 = vmatprep.subr.bf16.mxu0 0
        %680 = vmatpush1.bf16.msra.mxu0 %v607
        %681 = vmatprep.subr.bf16.mxu0 0
        %682 = vmatpush1.bf16.msra.mxu0 %v606
        %683 = vmatprep.subr.bf16.mxu0 0
        %684 = vmatpush1.bf16.msra.mxu0 %v605
        %685 = vmatprep.subr.bf16.mxu0 0
        %686 = vmatpush1.bf16.msra.mxu0 %v604
        %687 = vmatprep.subr.bf16.mxu0 0
        %688 = vmatpush1.bf16.msra.mxu0 %v603
        %689 = vmatprep.subr.bf16.mxu0 0
        %690 = vmatpush1.bf16.msra.mxu0 %v602
        %691 = vmatprep.subr.bf16.mxu0 0
        %692 = vmatpush2.bf16.msra.mxu0 0
        %693 = vmatprep.subr.bf16.mxu0 0
        %694 = vmatpush2.bf16.msra.mxu0 0
        %695 = vmatprep.subr.bf16.mxu0 0
        %696 = vmatpush2.bf16.msra.mxu0 0
        %697 = vmatprep.subr.bf16.mxu0 0
        %698 = vmatpush2.bf16.msra.mxu0 0
        %699 = vmatprep.subr.bf16.mxu0 0
        %700 = vmatpush2.bf16.msra.mxu0 0
        %701 = vmatprep.subr.bf16.mxu0 0
        %702 = vmatpush2.bf16.msra.mxu0 0
        %703 = vmatprep.subr.bf16.mxu0 0
        %704 = vmatpush2.bf16.msra.mxu0 0
        %705 = vmatprep.subr.bf16.mxu0 0
        %706 = vmatpush2.bf16.msra.mxu0 0
        %707 = vmatprep.mubr.bf16.mxu0 0
        %708 = vmatmul.mubr.bf16.gmra.mxu0 %v486
        %v709 = vpop.f32.mrf.mxu0
        %v710 = vadd.f32 %v669, %v709
        %v711 = vpop.f32.mrf.mxu0
        %v712 = vpop.f32.mrf.mxu0
        %v713 = vadd.f32 %v672, %v712
        %v714 = vpop.f32.mrf.mxu0
        %715 = vdwg.mxu0
        %v716 = vmax.f32 %v710, 0.0
        %v717 = vmax.f32 %v713, 0.0
        %s718 = ssub.s32 %s370, 1
        %v719 = vstv %s718
        %v720 = vadd.s32 %v719, %v373
        %v721 = vadd.s32 %v719, %v374
        %vm722 = vcmp.ge.s32.totalorder %v720, 0
        %vm723 = vcmp.ge.s32.totalorder %v721, 0
        %vm724 = vcmp.lt.s32.totalorder %v720, 20
        %vm725 = vcmp.lt.s32.totalorder %v721, 20
        %vm726 = vmand %vm722, %vm724
        %vm727 = vmand %vm723, %vm725
        %v728 = vsel %vm726, 1, 0
        %v729 = vsel %vm727, 1, 0
        %vm730 = vcmp.eq.s32.totalorder %v728, 1
        %vm731 = vcmp.eq.s32.totalorder %v729, 1
        %v732 = vsel %vm730, %v716, 0.0
        %v733 = vsel %vm731, %v717, 0.0
        %v734 = vpack.c.bf16 %v733, %v732
        %v735 = vld [vmem:[#allocation6] sm:$0xf]
        %v736 = vld [vmem:[#allocation6 + $0x4] sm:$0xf]
        %v737 = vld [vmem:[#allocation6 + $0x8] sm:$0xf]
        %v738 = vld [vmem:[#allocation6 + $0xc] sm:$0xf]
        %v739 = vld [vmem:[#allocation6 + $0x10] sm:$0xf]
        %v740 = vld [vmem:[#allocation6 + $0x14] sm:$0xf]
        %v741 = vld [vmem:[#allocation6 + $0x18] sm:$0xf]
        %v742 = vld [vmem:[#allocation6 + $0x1c] sm:$0xf]
        %v743 = vld [vmem:[#allocation6 + $0x20] sm:$0xf]
        %v744 = vld [vmem:[#allocation6 + $0x24] sm:$0xf]
        %v745 = vld [vmem:[#allocation6 + $0x28] sm:$0xf]
        %v746 = vld [vmem:[#allocation6 + $0x2c] sm:$0xf]
        %v747 = vld [vmem:[#allocation6 + $0x30] sm:$0xf]
        %v748 = vld [vmem:[#allocation6 + $0x34] sm:$0xf]
        %v749 = vld [vmem:[#allocation6 + $0x38] sm:$0xf]
        %v750 = vld [vmem:[#allocation6 + $0x3c] sm:$0xf]
        %v767 = vunpack.c.l.b16 %v735
        %v768 = vunpack.c.l.b16 %v736
        %v769 = vunpack.c.l.b16 %v737
        %v770 = vunpack.c.l.b16 %v738
        %v771 = vunpack.c.l.b16 %v739
        %v772 = vunpack.c.l.b16 %v740
        %v773 = vunpack.c.l.b16 %v741
        %v774 = vunpack.c.l.b16 %v742
        %v775 = vunpack.c.l.b16 %v743
        %v776 = vunpack.c.l.b16 %v744
        %v777 = vunpack.c.l.b16 %v745
        %v778 = vunpack.c.l.b16 %v746
        %v779 = vunpack.c.l.b16 %v747
        %v780 = vunpack.c.l.b16 %v748
        %v781 = vunpack.c.l.b16 %v749
        %v782 = vunpack.c.l.b16 %v750
        %v783 = vpack.c.b16 %v768, %v767
        %v784 = vpack.c.b16 %v770, %v769
        %v785 = vpack.c.b16 %v772, %v771
        %v786 = vpack.c.b16 %v774, %v773
        %v787 = vpack.c.b16 %v776, %v775
        %v788 = vpack.c.b16 %v778, %v777
        %v789 = vpack.c.b16 %v780, %v779
        %v790 = vpack.c.b16 %v782, %v781
        %799 = vmatprep.subr.bf16.mxu0 0
        %800 = vmatpush1.bf16.msra.mxu0 %v790
        %801 = vmatprep.subr.bf16.mxu0 0
        %802 = vmatpush1.bf16.msra.mxu0 %v789
        %803 = vmatprep.subr.bf16.mxu0 0
        %804 = vmatpush1.bf16.msra.mxu0 %v788
        %805 = vmatprep.subr.bf16.mxu0 0
        %806 = vmatpush1.bf16.msra.mxu0 %v787
        %807 = vmatprep.subr.bf16.mxu0 0
        %808 = vmatpush1.bf16.msra.mxu0 %v786
        %809 = vmatprep.subr.bf16.mxu0 0
        %810 = vmatpush1.bf16.msra.mxu0 %v785
        %811 = vmatprep.subr.bf16.mxu0 0
        %812 = vmatpush1.bf16.msra.mxu0 %v784
        %813 = vmatprep.subr.bf16.mxu0 0
        %814 = vmatpush1.bf16.msra.mxu0 %v783
        %815 = vmatprep.subr.bf16.mxu0 0
        %816 = vmatpush2.bf16.msra.mxu0 0
        %817 = vmatprep.subr.bf16.mxu0 0
        %818 = vmatpush2.bf16.msra.mxu0 0
        %819 = vmatprep.subr.bf16.mxu0 0
        %820 = vmatpush2.bf16.msra.mxu0 0
        %821 = vmatprep.subr.bf16.mxu0 0
        %822 = vmatpush2.bf16.msra.mxu0 0
        %823 = vmatprep.subr.bf16.mxu0 0
        %824 = vmatpush2.bf16.msra.mxu0 0
        %825 = vmatprep.subr.bf16.mxu0 0
        %826 = vmatpush2.bf16.msra.mxu0 0
        %827 = vmatprep.subr.bf16.mxu0 0
        %828 = vmatpush2.bf16.msra.mxu0 0
        %829 = vmatprep.subr.bf16.mxu0 0
        %830 = vmatpush2.bf16.msra.mxu0 0
        %831 = vmatprep.mubr.bf16.mxu0 0
        %832 = vmatmul.mubr.bf16.gmra.mxu0 %v734
        %v833 = vpop.f32.mrf.mxu0
        %v834 = vadd.f32 0.0, %v833
        %v835 = vpop.f32.mrf.mxu0
        %v836 = vpop.f32.mrf.mxu0
        %v837 = vpop.f32.mrf.mxu0
        %838 = vdwg.mxu0
        %s839 = scalar_lea.vmem [#allocation6], 64
        %v840 = vld [vmem:[%s839] sm:$0xf]
        %v841 = vld [vmem:[%s839 + $0x4] sm:$0xf]
        %v842 = vld [vmem:[%s839 + $0x8] sm:$0xf]
        %v843 = vld [vmem:[%s839 + $0xc] sm:$0xf]
        %v844 = vld [vmem:[%s839 + $0x10] sm:$0xf]
        %v845 = vld [vmem:[%s839 + $0x14] sm:$0xf]
        %v846 = vld [vmem:[%s839 + $0x18] sm:$0xf]
        %v847 = vld [vmem:[%s839 + $0x1c] sm:$0xf]
        %v848 = vld [vmem:[%s839 + $0x20] sm:$0xf]
        %v849 = vld [vmem:[%s839 + $0x24] sm:$0xf]
        %v850 = vld [vmem:[%s839 + $0x28] sm:$0xf]
        %v851 = vld [vmem:[%s839 + $0x2c] sm:$0xf]
        %v852 = vld [vmem:[%s839 + $0x30] sm:$0xf]
        %v853 = vld [vmem:[%s839 + $0x34] sm:$0xf]
        %v854 = vld [vmem:[%s839 + $0x38] sm:$0xf]
        %v855 = vld [vmem:[%s839 + $0x3c] sm:$0xf]
        %v872 = vunpack.c.l.b16 %v840
        %v873 = vunpack.c.l.b16 %v841
        %v874 = vunpack.c.l.b16 %v842
        %v875 = vunpack.c.l.b16 %v843
        %v876 = vunpack.c.l.b16 %v844
        %v877 = vunpack.c.l.b16 %v845
        %v878 = vunpack.c.l.b16 %v846
        %v879 = vunpack.c.l.b16 %v847
        %v880 = vunpack.c.l.b16 %v848
        %v881 = vunpack.c.l.b16 %v849
        %v882 = vunpack.c.l.b16 %v850
        %v883 = vunpack.c.l.b16 %v851
        %v884 = vunpack.c.l.b16 %v852
        %v885 = vunpack.c.l.b16 %v853
        %v886 = vunpack.c.l.b16 %v854
        %v887 = vunpack.c.l.b16 %v855
        %v888 = vpack.c.b16 %v873, %v872
        %v889 = vpack.c.b16 %v875, %v874
        %v890 = vpack.c.b16 %v877, %v876
        %v891 = vpack.c.b16 %v879, %v878
        %v892 = vpack.c.b16 %v881, %v880
        %v893 = vpack.c.b16 %v883, %v882
        %v894 = vpack.c.b16 %v885, %v884
        %v895 = vpack.c.b16 %v887, %v886
        %904 = vmatprep.subr.bf16.mxu0 0
        %905 = vmatpush1.bf16.msra.mxu0 %v895
        %906 = vmatprep.subr.bf16.mxu0 0
        %907 = vmatpush1.bf16.msra.mxu0 %v894
        %908 = vmatprep.subr.bf16.mxu0 0
        %909 = vmatpush1.bf16.msra.mxu0 %v893
        %910 = vmatprep.subr.bf16.mxu0 0
        %911 = vmatpush1.bf16.msra.mxu0 %v892
        %912 = vmatprep.subr.bf16.mxu0 0
        %913 = vmatpush1.bf16.msra.mxu0 %v891
        %914 = vmatprep.subr.bf16.mxu0 0
        %915 = vmatpush1.bf16.msra.mxu0 %v890
        %916 = vmatprep.subr.bf16.mxu0 0
        %917 = vmatpush1.bf16.msra.mxu0 %v889
        %918 = vmatprep.subr.bf16.mxu0 0
        %919 = vmatpush1.bf16.msra.mxu0 %v888
        %920 = vmatprep.subr.bf16.mxu0 0
        %921 = vmatpush2.bf16.msra.mxu0 0
        %922 = vmatprep.subr.bf16.mxu0 0
        %923 = vmatpush2.bf16.msra.mxu0 0
        %924 = vmatprep.subr.bf16.mxu0 0
        %925 = vmatpush2.bf16.msra.mxu0 0
        %926 = vmatprep.subr.bf16.mxu0 0
        %927 = vmatpush2.bf16.msra.mxu0 0
        %928 = vmatprep.subr.bf16.mxu0 0
        %929 = vmatpush2.bf16.msra.mxu0 0
        %930 = vmatprep.subr.bf16.mxu0 0
        %931 = vmatpush2.bf16.msra.mxu0 0
        %932 = vmatprep.subr.bf16.mxu0 0
        %933 = vmatpush2.bf16.msra.mxu0 0
        %934 = vmatprep.subr.bf16.mxu0 0
        %935 = vmatpush2.bf16.msra.mxu0 0
        %936 = vmatprep.mubr.bf16.mxu0 0
        %937 = vmatmul.mubr.bf16.gmra.mxu0 %v734
        %v938 = vpop.f32.mrf.mxu0
        %v939 = vadd.f32 0.0, %v938
        %v940 = vpop.f32.mrf.mxu0
        %v941 = vpop.f32.mrf.mxu0
        %v942 = vadd.f32 0.0, %v941
        %v943 = vpop.f32.mrf.mxu0
        %944 = vdwg.mxu0
        %vm947 = vcmask 1046528
        %v948 = vrot.slane %v939, 1
        %v949 = vrot.slane %v942, 1
        %v950 = vsel %vm947, %v948, %v949
        %v952 = vadd.f32 %v834, %v950
        %s953 = scalar_lea.vmem [#allocation6], 128
        %v954 = vld [vmem:[%s953] sm:$0xf]
        %v955 = vld [vmem:[%s953 + $0x4] sm:$0xf]
        %v956 = vld [vmem:[%s953 + $0x8] sm:$0xf]
        %v957 = vld [vmem:[%s953 + $0xc] sm:$0xf]
        %v958 = vld [vmem:[%s953 + $0x10] sm:$0xf]
        %v959 = vld [vmem:[%s953 + $0x14] sm:$0xf]
        %v960 = vld [vmem:[%s953 + $0x18] sm:$0xf]
        %v961 = vld [vmem:[%s953 + $0x1c] sm:$0xf]
        %v962 = vld [vmem:[%s953 + $0x20] sm:$0xf]
        %v963 = vld [vmem:[%s953 + $0x24] sm:$0xf]
        %v964 = vld [vmem:[%s953 + $0x28] sm:$0xf]
        %v965 = vld [vmem:[%s953 + $0x2c] sm:$0xf]
        %v966 = vld [vmem:[%s953 + $0x30] sm:$0xf]
        %v967 = vld [vmem:[%s953 + $0x34] sm:$0xf]
        %v968 = vld [vmem:[%s953 + $0x38] sm:$0xf]
        %v969 = vld [vmem:[%s953 + $0x3c] sm:$0xf]
        %v986 = vunpack.c.l.b16 %v954
        %v987 = vunpack.c.l.b16 %v955
        %v988 = vunpack.c.l.b16 %v956
        %v989 = vunpack.c.l.b16 %v957
        %v990 = vunpack.c.l.b16 %v958
        %v991 = vunpack.c.l.b16 %v959
        %v992 = vunpack.c.l.b16 %v960
        %v993 = vunpack.c.l.b16 %v961
        %v994 = vunpack.c.l.b16 %v962
        %v995 = vunpack.c.l.b16 %v963
        %v996 = vunpack.c.l.b16 %v964
        %v997 = vunpack.c.l.b16 %v965
        %v998 = vunpack.c.l.b16 %v966
        %v999 = vunpack.c.l.b16 %v967
        %v1000 = vunpack.c.l.b16 %v968
        %v1001 = vunpack.c.l.b16 %v969
        %v1002 = vpack.c.b16 %v987, %v986
        %v1003 = vpack.c.b16 %v989, %v988
        %v1004 = vpack.c.b16 %v991, %v990
        %v1005 = vpack.c.b16 %v993, %v992
        %v1006 = vpack.c.b16 %v995, %v994
        %v1007 = vpack.c.b16 %v997, %v996
        %v1008 = vpack.c.b16 %v999, %v998
        %v1009 = vpack.c.b16 %v1001, %v1000
        %1018 = vmatprep.subr.bf16.mxu0 0
        %1019 = vmatpush1.bf16.msra.mxu0 %v1009
        %1020 = vmatprep.subr.bf16.mxu0 0
        %1021 = vmatpush1.bf16.msra.mxu0 %v1008
        %1022 = vmatprep.subr.bf16.mxu0 0
        %1023 = vmatpush1.bf16.msra.mxu0 %v1007
        %1024 = vmatprep.subr.bf16.mxu0 0
        %1025 = vmatpush1.bf16.msra.mxu0 %v1006
        %1026 = vmatprep.subr.bf16.mxu0 0
        %1027 = vmatpush1.bf16.msra.mxu0 %v1005
        %1028 = vmatprep.subr.bf16.mxu0 0
        %1029 = vmatpush1.bf16.msra.mxu0 %v1004
        %1030 = vmatprep.subr.bf16.mxu0 0
        %1031 = vmatpush1.bf16.msra.mxu0 %v1003
        %1032 = vmatprep.subr.bf16.mxu0 0
        %1033 = vmatpush1.bf16.msra.mxu0 %v1002
        %1034 = vmatprep.subr.bf16.mxu0 0
        %1035 = vmatpush2.bf16.msra.mxu0 0
        %1036 = vmatprep.subr.bf16.mxu0 0
        %1037 = vmatpush2.bf16.msra.mxu0 0
        %1038 = vmatprep.subr.bf16.mxu0 0
        %1039 = vmatpush2.bf16.msra.mxu0 0
        %1040 = vmatprep.subr.bf16.mxu0 0
        %1041 = vmatpush2.bf16.msra.mxu0 0
        %1042 = vmatprep.subr.bf16.mxu0 0
        %1043 = vmatpush2.bf16.msra.mxu0 0
        %1044 = vmatprep.subr.bf16.mxu0 0
        %1045 = vmatpush2.bf16.msra.mxu0 0
        %1046 = vmatprep.subr.bf16.mxu0 0
        %1047 = vmatpush2.bf16.msra.mxu0 0
        %1048 = vmatprep.subr.bf16.mxu0 0
        %1049 = vmatpush2.bf16.msra.mxu0 0
        %1050 = vmatprep.mubr.bf16.mxu0 0
        %1051 = vmatmul.mubr.bf16.gmra.mxu0 %v734
        %v1052 = vpop.f32.mrf.mxu0
        %v1053 = vadd.f32 0.0, %v1052
        %v1054 = vpop.f32.mrf.mxu0
        %v1055 = vpop.f32.mrf.mxu0
        %v1056 = vadd.f32 0.0, %v1055
        %v1057 = vpop.f32.mrf.mxu0
        %1058 = vdwg.mxu0
        %vm1061 = vcmask 1045504
        %v1062 = vrot.slane %v1053, 2
        %v1063 = vrot.slane %v1056, 2
        %v1064 = vsel %vm1061, %v1062, %v1063
        %v1066 = vadd.f32 %v952, %v1064
        %v1067 = vld [vmem:[%s5] sm:$0x1]
        %v1069 = vlaneseq
        %v1070 = vshrl.u32 %v1069, 7
        %v1071 = vsub.s32 0, %v1070
        %v1072 = vrot.slane %v1067, %v1071
        %v1074 = vadd.f32 %v1066, %v1072
        %1075 = vst [vmem:[%s355] sm:$0xff] %v1074
        %p1076 = scmp.lt.s32.totalorder %s25, 1
        %s1077 = scalar_select %p1076, %s25, 1
        %p1078 = scmp.lt.s32.totalorder %s26, 2
        %s1079 = scalar_select %p1078, %s26, 2
        %s1080 = smul.addr %s1077, 3
        %s1081 = sadd.s32 %s1079, %s1080
        %s1082 = smul.addr %s1081, 8
        %s1083 = scalar_lea.vmem %s6, %s1082
        // Predicated region
        $region57: #{tpu_custom_call.1} parent=43 // pred_check
          %p1084 = pneg %p193
        $region58: #{tpu_custom_call.1} parent=43 // pred_check_branch
          %1086 = sbr.rel (%p1084) target = $region60
        $region59: #{tpu_custom_call.1} parent=43 // pred_region
          _
        $region60: #{tpu_custom_call.1} parent=43 // pred_fallthru
          _
      $region44: #{tpu_custom_call.1} parent=5 // pred_fallthru
        _
      %p1087 = scmp.le.s32.totalorder 2, %s16
      // Predicated region
      $region61: #{tpu_custom_call.1} parent=5 // pred_check
        %p1088 = pneg %p1087
      $region62: #{tpu_custom_call.1} parent=5 // pred_check_branch
        %1090 = sbr.rel (%p1088) target = $region64
      $region63: #{tpu_custom_call.1} parent=5 // pred_region
        %s1091 = ssub.s32 %s16, 2
        // Predicated region
        $region65: #{tpu_custom_call.1} parent=63 // pred_check
          %p1092 = pneg %p199
        $region66: #{tpu_custom_call.1} parent=63 // pred_check_branch
          %1094 = sbr.rel (%p1092) target = $region68
        $region67: #{tpu_custom_call.1} parent=63 // pred_region
          %p1095 = scmp.lt.s32.totalorder %s27, 1
          %s1096 = scalar_select %p1095, %s27, 1
          %p1097 = scmp.lt.s32.totalorder %s28, 2
          %s1098 = scalar_select %p1097, %s28, 2
          %s1099 = smul.addr %s1096, 3
          %s1100 = sadd.s32 %s1098, %s1099
          %s1101 = smul.addr %s1100, 8
          %s1102 = scalar_lea.vmem %s6, %s1101
        $region68: #{tpu_custom_call.1} parent=63 // pred_fallthru
          _
      $region64: #{tpu_custom_call.1} parent=5 // pred_fallthru
        _
    $region6: #{tpu_custom_call.1} parent=1 // loop_footer
      %s20 = sadd.s32 1, %s16
    $region7: #{tpu_custom_call.1} parent=1 // loop_footer_branch
      %15 = sbr.rel target = $region3
    $region8: #{tpu_custom_call.1} parent=1 // loop_exit
      _
    %1103 = vsyncpa [#allocation3], 1
    %s1104 = scalar_lea.sflag [#allocation3], 1
    %1105 = vsyncpa %s1104, 1
    %1106 = vsyncpa [#allocation5], 1

// kernel: tpu_custom_call.1
$region0: #{tpu_custom_call.1}
  #allocation0 [shape = 'u32[]', space=smem, size = 0x4, offset = 0x4, fixed_abs, tag = 'smem constant byte address 0x4 - core index']
  #allocation1 [shape = 'u32[144,128]{1,0:T(1,128)}', space=vmem, size = 0x12000, scoped, tag = 'internal scratch']
  %s0 = inlined_call_operand.vmem [shape: bf16[2,20,128], index: 0, kind: input, shape index: {}]
  %s1 = inlined_call_operand.hbm [shape: bf16[2,3,16,128], index: 1, kind: input, shape index: {}]
  %s2 = inlined_call_operand.hbm [shape: bf16[384,128], index: 2, kind: input, shape index: {}]
  %s3 = inlined_call_operand.vmem [shape: f32[1,128], index: 3, kind: input, shape index: {}]
  %s4 = inlined_call_operand.hbm [shape: bf16[3,128,128], index: 4, kind: input, shape index: {}]
  %s5 = inlined_call_operand.vmem [shape: f32[1,128], index: 5, kind: input, shape index: {}]
  %s6 = inlined_call_operand.vmem [shape: f32[2,20,128], index: 6, kind: output, shape index: {}]
  %s7 = sld [smem:[#allocation0]]
  $region69: #{tpu_custom_call.1} parent=0
    _
  %s9 = ssub.s32 1, %s7
  %s10 = scalar_select 0, %s9, %s7
  $region1: #{tpu_custom_call.1} parent=0
    #allocation2 [shape = 'u8[8192]{0}', space=vmem, size = 0x2000, scoped, tag = 'input window, operand 1']
    #allocation3 [shape = 's32[2]{0}', space=sflag, size = 0x8, scoped, tag = 'scoped memory for tpu_custom_call.1']
    #allocation4 [shape = 'u8[98304]{0}', space=vmem, size = 0x18000, scoped, tag = 'input window, operand 2, single buffered']
    #allocation5 [shape = 's32[1]{0}', space=sflag, size = 0x4, scoped, tag = 'scoped memory for tpu_custom_call.1']
    #allocation6 [shape = 'u8[98304]{0}', space=vmem, size = 0x18000, scoped, tag = 'input window, operand 4, single buffered']
    %11 = vsyncpa [#allocation3], 0
    %s12 = scalar_lea.sflag [#allocation3], 1
    %13 = vsyncpa %s12, 0
    %14 = vsyncpa [#allocation5], 0
    loop: start=0, step=1, limit=8
    $region2: #{tpu_custom_call.1} parent=1 // loop_pre_header
      _
    $region3: #{tpu_custom_call.1} parent=1 // loop_header
      %s16 = sphi 0, %s20
      %p17 = scmp.ge.s32.totalorder %s16, 8
      %s23 = sphi 0, %s35
      %s24 = sphi 0, %s31
      %s25 = sphi 0, %s23
      %s26 = sphi 0, %s24
      %s27 = sphi 0, %s25
      %s28 = sphi 0, %s26
      %s40 = sphi 0, %s42
      %s43 = sphi 0, %s40
      %s44 = sphi 0, %s43
      %s60 = sphi 0, %s44
      %s68 = sphi 0, %s70
      %s71 = sphi 0, %s68
      %s72 = sphi 0, %s71
      %s88 = sphi 0, %s72
      %s92 = sphi 0, %s92
      %s94 = sphi 0, %s92
      %s95 = sphi 0, %s94
      %s109 = sphi 0, %s95
      %s113 = sphi 0, %s113
      %s115 = sphi 0, %s113
      %s116 = sphi 0, %s115
      %s130 = sphi 0, %s116
      %s134 = sphi 0, %s134
      %s136 = sphi 0, %s134
      %s137 = sphi 0, %s136
      %s151 = sphi 0, %s137
      %s155 = sphi 0, %s155
      %s157 = sphi 0, %s155
      %s158 = sphi 0, %s157
      %s172 = sphi 0, %s158
      %s180 = sphi 0, %s182
      %s183 = sphi 0, %s180
      %s184 = sphi 0, %s183
      %s200 = sphi 0, %s184
    $region4: #{tpu_custom_call.1} parent=1 // loop_header_branch
      %19 = sbr.rel (%p17) target = $region8
    $region5: #{tpu_custom_call.1} parent=1 // loop_body
      %s21 = ssub.s32 %s16, 1
      %s22 = ssub.s32 %s16, 2
      %s29 = sadd.s32 1, %s24
      %p30 = scmp.ge.s32.totalorder %s29, 3
      %s31 = scalar_select %p30, 0, %s29
      %s32 = sadd.s32 1, %s23
      %s33 = scalar_select %p30, %s32, %s23
      %p34 = scmp.ge.s32.totalorder %s33, 2
      %s35 = scalar_select %p34, 0, %s33
      %s36 = ssub.s32 %s23, %s35
      %s37 = ssub.s32 %s24, %s31
      %s38 = sor.u32 %s36, %s37
      %p39 = scmp.eq.s32.totalorder %s38, 0
      %s41 = sadd.s32 %s40, 1
      %s42 = scalar_select %p39, %s40, %s41
      %p45 = pneg %p39
      %p46 = scmp.eq.s32.totalorder %s16, 5
      %p47 = por %p45, %p46
      %p48 = scmp.ne.s32.totalorder %s40, %s43
      %p49 = scmp.eq.s32.totalorder %s16, 0
      %p50 = por %p48, %p49
      %p51 = scmp.ne.s32.totalorder %s40, %s43
      %p52 = scmp.eq.s32.totalorder %s21, 5
      %p53 = por %p51, %p52
      %p54 = scmp.ne.s32.totalorder %s43, %s44
      %p55 = scmp.eq.s32.totalorder %s21, 0
      %p56 = por %p54, %p55
      %p57 = scmp.ne.s32.totalorder %s43, %s44
      %p58 = scmp.eq.s32.totalorder %s22, 5
      %p59 = por %p57, %p58
      %p61 = scmp.ne.s32.totalorder %s44, %s60
      %p62 = scmp.eq.s32.totalorder %s22, 0
      %p63 = por %p61, %p62
      %s64 = ssub.s32 %s23, %s35
      %s65 = ssub.s32 %s24, %s31
      %s66 = sor.u32 %s64, %s65
      %p67 = scmp.eq.s32.totalorder %s66, 0
      %s69 = sadd.s32 %s68, 1
      %s70 = scalar_select %p67, %s68, %s69
      %p73 = pneg %p67
      %p74 = scmp.eq.s32.totalorder %s16, 5
      %p75 = por %p73, %p74
      %p76 = scmp.ne.s32.totalorder %s68, %s71
      %p77 = scmp.eq.s32.totalorder %s16, 0
      %p78 = por %p76, %p77
      %p79 = scmp.ne.s32.totalorder %s68, %s71
      %p80 = scmp.eq.s32.totalorder %s21, 5
      %p81 = por %p79, %p80
      %p82 = scmp.ne.s32.totalorder %s71, %s72
      %p83 = scmp.eq.s32.totalorder %s21, 0
      %p84 = por %p82, %p83
      %p85 = scmp.ne.s32.totalorder %s71, %s72
      %p86 = scmp.eq.s32.totalorder %s22, 5
      %p87 = por %p85, %p86
      %p89 = scmp.ne.s32.totalorder %s72, %s88
      %p90 = scmp.eq.s32.totalorder %s22, 0
      %p91 = por %p89, %p90
      %s93 = sadd.s32 %s92, 1
      %p96 = scmp.eq.s32.totalorder %s16, 5
      %p97 = scmp.ne.s32.totalorder %s92, %s94
      %p98 = scmp.eq.s32.totalorder %s16, 0
      %p99 = por %p97, %p98
      %p100 = scmp.ne.s32.totalorder %s92, %s94
      %p101 = scmp.eq.s32.totalorder %s21, 5
      %p102 = por %p100, %p101
      %p103 = scmp.ne.s32.totalorder %s94, %s95
      %p104 = scmp.eq.s32.totalorder %s21, 0
      %p105 = por %p103, %p104
      %p106 = scmp.ne.s32.totalorder %s94, %s95
      %p107 = scmp.eq.s32.totalorder %s22, 5
      %p108 = por %p106, %p107
      %p110 = scmp.ne.s32.totalorder %s95, %s109
      %p111 = scmp.eq.s32.totalorder %s22, 0
      %p112 = por %p110, %p111
      %s114 = sadd.s32 %s113, 1
      %p117 = scmp.eq.s32.totalorder %s16, 5
      %p118 = scmp.ne.s32.totalorder %s113, %s115
      %p119 = scmp.eq.s32.totalorder %s16, 0
      %p120 = por %p118, %p119
      %p121 = scmp.ne.s32.totalorder %s113, %s115
      %p122 = scmp.eq.s32.totalorder %s21, 5
      %p123 = por %p121, %p122
      %p124 = scmp.ne.s32.totalorder %s115, %s116
      %p125 = scmp.eq.s32.totalorder %s21, 0
      %p126 = por %p124, %p125
      %p127 = scmp.ne.s32.totalorder %s115, %s116
      %p128 = scmp.eq.s32.totalorder %s22, 5
      %p129 = por %p127, %p128
      %p131 = scmp.ne.s32.totalorder %s116, %s130
      %p132 = scmp.eq.s32.totalorder %s22, 0
      %p133 = por %p131, %p132
      %s135 = sadd.s32 %s134, 1
      %p138 = scmp.eq.s32.totalorder %s16, 5
      %p139 = scmp.ne.s32.totalorder %s134, %s136
      %p140 = scmp.eq.s32.totalorder %s16, 0
      %p141 = por %p139, %p140
      %p142 = scmp.ne.s32.totalorder %s134, %s136
      %p143 = scmp.eq.s32.totalorder %s21, 5
      %p144 = por %p142, %p143
      %p145 = scmp.ne.s32.totalorder %s136, %s137
      %p146 = scmp.eq.s32.totalorder %s21, 0
      %p147 = por %p145, %p146
      %p148 = scmp.ne.s32.totalorder %s136, %s137
      %p149 = scmp.eq.s32.totalorder %s22, 5
      %p150 = por %p148, %p149
      %p152 = scmp.ne.s32.totalorder %s137, %s151
      %p153 = scmp.eq.s32.totalorder %s22, 0
      %p154 = por %p152, %p153
      %s156 = sadd.s32 %s155, 1
      %p159 = scmp.eq.s32.totalorder %s16, 5
      %p160 = scmp.ne.s32.totalorder %s155, %s157
      %p161 = scmp.eq.s32.totalorder %s16, 0
      %p162 = por %p160, %p161
      %p163 = scmp.ne.s32.totalorder %s155, %s157
      %p164 = scmp.eq.s32.totalorder %s21, 5
      %p165 = por %p163, %p164
      %p166 = scmp.ne.s32.totalorder %s157, %s158
      %p167 = scmp.eq.s32.totalorder %s21, 0
      %p168 = por %p166, %p167
      %p169 = scmp.ne.s32.totalorder %s157, %s158
      %p170 = scmp.eq.s32.totalorder %s22, 5
      %p171 = por %p169, %p170
      %p173 = scmp.ne.s32.totalorder %s158, %s172
      %p174 = scmp.eq.s32.totalorder %s22, 0
      %p175 = por %p173, %p174
      %s176 = ssub.s32 %s23, %s35
      %s177 = ssub.s32 %s24, %s31
      %s178 = sor.u32 %s176, %s177
      %p179 = scmp.eq.s32.totalorder %s178, 0
      %s181 = sadd.s32 %s180, 1
      %s182 = scalar_select %p179, %s180, %s181
      %p185 = pneg %p179
      %p186 = scmp.eq.s32.totalorder %s16, 5
      %p187 = por %p185, %p186
      %p188 = scmp.ne.s32.totalorder %s180, %s183
      %p189 = scmp.eq.s32.totalorder %s16, 0
      %p190 = por %p188, %p189
      %p191 = scmp.ne.s32.totalorder %s180, %s183
      %p192 = scmp.eq.s32.totalorder %s21, 5
      %p193 = por %p191, %p192
      %p194 = scmp.ne.s32.totalorder %s183, %s184
      %p195 = scmp.eq.s32.totalorder %s21, 0
      %p196 = por %p194, %p195
      %p197 = scmp.ne.s32.totalorder %s183, %s184
      %p198 = scmp.eq.s32.totalorder %s22, 5
      %p199 = por %p197, %p198
      %p201 = scmp.ne.s32.totalorder %s184, %s200
      %p202 = scmp.eq.s32.totalorder %s22, 0
      %p203 = por %p201, %p202
      %p204 = scmp.le.s32.totalorder 1, %s16
      %p205 = scmp.lt.s32.totalorder %s16, 7
      %p206 = pnand %p204, %p205
      %p207 = pneg %p206
      // Predicated region
      $region9: #{tpu_custom_call.1} parent=5 // pred_check
        _
      $region10: #{tpu_custom_call.1} parent=5 // pred_check_branch
        %209 = sbr.rel (%p206) target = $region12
      $region11: #{tpu_custom_call.1} parent=5 // pred_region
        %s210 = ssub.s32 %s16, 1
        // Predicated region
        $region13: #{tpu_custom_call.1} parent=11 // pred_check
          %p211 = pneg %p105
        $region14: #{tpu_custom_call.1} parent=11 // pred_check_branch
          %213 = sbr.rel (%p211) target = $region16
        $region15: #{tpu_custom_call.1} parent=11 // pred_region
          %s215 = ssub.s32 3072, 3072
          %216 = vsyncadd [#allocation5], %s215
          %s217 = sshll.u32 [#allocation4], 4
          %s218 = int_to_ptr.vmem [resolvable:$true] %s217
          %223 = dma.hbm_to_vmem [thread:$0]  %s2, 3072, %s218, [#allocation5], 64, 64, 4
        $region16: #{tpu_custom_call.1} parent=11 // pred_fallthru
          _
        // Predicated region
        $region17: #{tpu_custom_call.1} parent=11 // pred_check
          %p224 = pneg %p126
        $region18: #{tpu_custom_call.1} parent=11 // pred_check_branch
          %226 = sbr.rel (%p224) target = $region20
        $region19: #{tpu_custom_call.1} parent=11 // pred_region
          _
        $region20: #{tpu_custom_call.1} parent=11 // pred_fallthru
          _
        // Predicated region
        $region21: #{tpu_custom_call.1} parent=11 // pred_check
          %p227 = pneg %p147
        $region22: #{tpu_custom_call.1} parent=11 // pred_check_branch
          %229 = sbr.rel (%p227) target = $region24
        $region23: #{tpu_custom_call.1} parent=11 // pred_region
          %s231 = ssub.s32 3072, 3072
          %232 = vsyncadd [#allocation5], %s231
          %s233 = sshll.u32 [#allocation6], 4
          %s234 = int_to_ptr.vmem [resolvable:$true] %s233
          %239 = dma.hbm_to_vmem [thread:$0]  %s4, 3072, %s234, [#allocation5], 64, 64, 4
        $region24: #{tpu_custom_call.1} parent=11 // pred_fallthru
          _
        // Predicated region
        $region25: #{tpu_custom_call.1} parent=11 // pred_check
          %p240 = pneg %p168
        $region26: #{tpu_custom_call.1} parent=11 // pred_check_branch
          %242 = sbr.rel (%p240) target = $region28
        $region27: #{tpu_custom_call.1} parent=11 // pred_region
          _
        $region28: #{tpu_custom_call.1} parent=11 // pred_fallthru
          _
      $region12: #{tpu_custom_call.1} parent=5 // pred_fallthru
        _
      %p243 = scmp.lt.s32.totalorder %s16, 6
      // Predicated region
      $region29: #{tpu_custom_call.1} parent=5 // pred_check
        %p244 = pneg %p243
      $region30: #{tpu_custom_call.1} parent=5 // pred_check_branch
        %246 = sbr.rel (%p244) target = $region32
      $region31: #{tpu_custom_call.1} parent=5 // pred_region
        // Predicated region
        $region33: #{tpu_custom_call.1} parent=31 // pred_check
          %p247 = pneg %p50
        $region34: #{tpu_custom_call.1} parent=31 // pred_check_branch
          %249 = sbr.rel (%p247) target = $region36
        $region35: #{tpu_custom_call.1} parent=31 // pred_region
          %p250 = scmp.lt.s32.totalorder %s23, 1
          %s251 = scalar_select %p250, %s23, 1
          %p252 = scmp.lt.s32.totalorder %s24, 2
          %s253 = scalar_select %p252, %s24, 2
          %s254 = smul.addr %s251, 3
          %s255 = sadd.s32 %s253, %s254
          %s256 = smul.addr %s255, 4
          %s257 = scalar_lea.vmem %s0, %s256
        $region36: #{tpu_custom_call.1} parent=31 // pred_fallthru
          _
        // Predicated region
        $region37: #{tpu_custom_call.1} parent=31 // pred_check
          %p258 = pneg %p78
        $region38: #{tpu_custom_call.1} parent=31 // pred_check_branch
          %260 = sbr.rel (%p258) target = $region40
        $region39: #{tpu_custom_call.1} parent=31 // pred_region
          %s261 = sand.u32 %s68, 1
          %s262 = scalar_lea.sflag [#allocation3], %s261
          %s263 = sand.u32 %s68, 1
          %s264 = smul.addr %s263, 8
          %s265 = scalar_lea.vmem [#allocation2], %s264
          %s267 = ssub.s32 128, 128
          %268 = vsyncadd %s262, %s267
          %s269 = smul.addr %s24, 2
          %s270 = smul.addr %s23, 6
          %s271 = sadd.s32 %s269, %s270
          %s272 = smul.addr %s271, 64
          %s273 = scalar_lea.hbm %s1, %s272
          %s274 = sshll.u32 %s265, 4
          %s275 = int_to_ptr.vmem [resolvable:$true] %s274
          %280 = dma.hbm_to_vmem [thread:$0]  %s273, 128, %s275, %s262, 64, 64, 4
        $region40: #{tpu_custom_call.1} parent=31 // pred_fallthru
          _
      $region32: #{tpu_custom_call.1} parent=5 // pred_fallthru
        _
      %p281 = scmp.le.s32.totalorder 1, %s16
      %p282 = scmp.lt.s32.totalorder %s16, 7
      %p283 = pnand %p281, %p282
      %p284 = pneg %p283
      // Predicated region
      $region41: #{tpu_custom_call.1} parent=5 // pred_check
        _
      $region42: #{tpu_custom_call.1} parent=5 // pred_check_branch
        %286 = sbr.rel (%p283) target = $region44
      $region43: #{tpu_custom_call.1} parent=5 // pred_region
        %s287 = ssub.s32 %s16, 1
        %s288 = sand.u32 %s71, 1
        %s289 = scalar_lea.sflag [#allocation3], %s288
        %s290 = sand.u32 %s71, 1
        %s291 = smul.addr %s290, 8
        %s292 = scalar_lea.vmem [#allocation2], %s291
        // Predicated region
        $region45: #{tpu_custom_call.1} parent=43 // pred_check
          %p293 = pneg %p84
        $region46: #{tpu_custom_call.1} parent=43 // pred_check_branch
          %295 = sbr.rel (%p293) target = $region48
        $region47: #{tpu_custom_call.1} parent=43 // pred_region
          %296 = dma.done %s289, 128
        $region48: #{tpu_custom_call.1} parent=43 // pred_fallthru
          _
        // Predicated region
        $region49: #{tpu_custom_call.1} parent=43 // pred_check
          %p297 = pneg %p105
        $region50: #{tpu_custom_call.1} parent=43 // pred_check_branch
          %299 = sbr.rel (%p297) target = $region52
        $region51: #{tpu_custom_call.1} parent=43 // pred_region
          %300 = dma.done [#allocation5], 3072
        $region52: #{tpu_custom_call.1} parent=43 // pred_fallthru
          _
        // Predicated region
        $region53: #{tpu_custom_call.1} parent=43 // pred_check
          %p301 = pneg %p147
        $region54: #{tpu_custom_call.1} parent=43 // pred_check_branch
          %303 = sbr.rel (%p301) target = $region56
        $region55: #{tpu_custom_call.1} parent=43 // pred_region
          %304 = dma.done [#allocation5], 3072
        $region56: #{tpu_custom_call.1} parent=43 // pred_fallthru
          _
        %p305 = scmp.lt.s32.totalorder %s25, 1
        %s306 = scalar_select %p305, %s25, 1
        %p307 = scmp.lt.s32.totalorder %s26, 2
        %s308 = scalar_select %p307, %s26, 2
        %s309 = smul.addr %s306, 3
        %s310 = sadd.s32 %s308, %s309
        %s311 = smul.addr %s310, 4
        %s312 = scalar_lea.vmem %s0, %s311
        %p313 = pneg %p56
        %p314 = pneg %p53
        %s315 = sand.u32 %s71, 1
        %s316 = scalar_lea.sflag [#allocation3], %s315
        %s317 = sand.u32 %s71, 1
        %s318 = smul.addr %s317, 8
        %s319 = scalar_lea.vmem [#allocation2], %s318
        %p320 = pneg %p84
        %p321 = pneg %p81
        %p322 = pneg %p105
        %p323 = pneg %p102
        %p324 = pneg %p126
        %p325 = pneg %p123
        %p326 = pneg %p147
        %p327 = pneg %p144
        %p328 = pneg %p168
        %p329 = pneg %p165
        %p330 = pneg %p196
        %p331 = pneg %p193
        %p332 = scmp.lt.s32.totalorder %s25, 1
        %s333 = scalar_select %p332, %s25, 1
        %p334 = scmp.lt.s32.totalorder %s26, 2
        %s335 = scalar_select %p334, %s26, 2
        %s336 = smul.addr %s333, 3
        %s337 = sadd.s32 %s335, %s336
        %s338 = smul.addr %s337, 8
        %s339 = scalar_lea.vmem %s6, %s338
        %p340 = scmp.lt.s32.totalorder %s25, 1
        %s341 = scalar_select %p340, %s25, 1
        %p342 = scmp.lt.s32.totalorder %s26, 2
        %s343 = scalar_select %p342, %s26, 2
        %s344 = smul.addr %s341, 3
        %s345 = sadd.s32 %s343, %s344
        %s346 = smul.addr %s345, 4
        %s347 = scalar_lea.vmem %s0, %s346
        %p348 = scmp.lt.s32.totalorder %s25, 1
        %s349 = scalar_select %p348, %s25, 1
        %p350 = scmp.lt.s32.totalorder %s26, 2
        %s351 = scalar_select %p350, %s26, 2
        %s352 = smul.addr %s349, 3
        %s353 = sadd.s32 %s351, %s352
        %s354 = smul.addr %s353, 8
        %s355 = scalar_lea.vmem %s6, %s354
        %v359 = vld [vmem:[%s347] sm:$0xf]
        %v360 = vld [vmem:[%s292] sm:$0xf]
        %v361 = vld [vmem:[%s292 + $0x4] sm:$0xf]
        %v363 = vunpack.c.l.b16 %v359
        %v364 = vpack.c.b16 %v363, %v363
        %vm365 = vcmask 1043456
        %v368 = vsel %vm365, %v360, %v364
        %s370 = smul.u32 %s26, 8
        %s371 = ssub.s32 %s370, 8
        %v372 = vlaneseq
        %v373 = vshrl.u32 %v372, 7
        %v374 = vadd.s32 %v373, 8
        %v375 = vadd.s32 %v373, 16
        %v376 = vstv %s371
        %v377 = vadd.s32 %v376, %v373
        %v378 = vadd.s32 %v376, %v374
        %v379 = vadd.s32 %v376, %v375
        %vm380 = vcmp.ge.s32.totalorder %v377, 0
        %vm381 = vcmp.ge.s32.totalorder %v378, 0
        %vm382 = vcmp.ge.s32.totalorder %v379, 0
        %vm383 = vcmp.lt.s32.totalorder %v377, 20
        %vm384 = vcmp.lt.s32.totalorder %v378, 20
        %vm385 = vcmp.lt.s32.totalorder %v379, 20
        %vm386 = vmand %vm380, %vm383
        %vm387 = vmand %vm381, %vm384
        %vm388 = vmand %vm382, %vm385
        %v389 = vsel %vm386, 1, 0
        %v390 = vsel %vm387, 1, 0
        %v391 = vsel %vm388, 1, 0
        %vm392 = vcmp.eq.s32.totalorder %v389, 1
        %vm393 = vcmp.eq.s32.totalorder %v390, 1
        %vm394 = vcmp.eq.s32.totalorder %v391, 1
        %vm395 = vmpackc.low %vm392, %vm392
        %vm396 = vmpackc.low %vm393, %vm393
        %vm397 = vmpackc.low %vm394, %vm394
        %v398 = vsel %vm395, 65537, 0
        %v399 = vsel %vm396, 65537, 0
        %v400 = vsel %vm397, 65537, 0
        %v401 = vunpack.c.l.b16 %v398
        %v402 = vunpack.c.l.b16 %v399
        %v403 = vunpack.c.l.b16 %v400
        %v404 = vpack.c.b16 %v402, %v401
        %v405 = vpack.c.b16 %v403, %v403
        %vm406 = vcmp.ne.s16.totalorder %v404, 0
        %vm407 = vcmp.ne.s16.totalorder %v405, 0
        %v408 = vsel %vm406, %v368, 0
        %v409 = vsel %vm407, %v361, 0
        %vm410 = vsmask.f32 7424
        %v412 = vshrl.u32 %v408, 16
        %v414 = vshll.u32 %v408, 16
        %v416 = vrot.slane %v414, 1
        %v417 = vor.u32 %v412, %v416
        %v419 = vshll.u32 %v409, 16
        %v421 = vrot.slane %v419, 1
        %v422 = vsel %vm410, %v417, %v421
        %vm425 = vcmask 1046528
        %v426 = vrot.slane %v408, 1
        %v427 = vrot.slane %v409, 1
        %v428 = vsel %vm425, %v426, %v427
        %v429 = vld [vmem:[#allocation4] sm:$0xf]
        %v430 = vld [vmem:[#allocation4 + $0x4] sm:$0xf]
        %v431 = vld [vmem:[#allocation4 + $0x8] sm:$0xf]
        %v432 = vld [vmem:[#allocation4 + $0xc] sm:$0xf]
        %v433 = vld [vmem:[#allocation4 + $0x10] sm:$0xf]
        %v434 = vld [vmem:[#allocation4 + $0x14] sm:$0xf]
        %v435 = vld [vmem:[#allocation4 + $0x18] sm:$0xf]
        %v436 = vld [vmem:[#allocation4 + $0x1c] sm:$0xf]
        %v437 = vld [vmem:[#allocation4 + $0x20] sm:$0xf]
        %v438 = vld [vmem:[#allocation4 + $0x24] sm:$0xf]
        %v439 = vld [vmem:[#allocation4 + $0x28] sm:$0xf]
        %v440 = vld [vmem:[#allocation4 + $0x2c] sm:$0xf]
        %v441 = vld [vmem:[#allocation4 + $0x30] sm:$0xf]
        %v442 = vld [vmem:[#allocation4 + $0x34] sm:$0xf]
        %v443 = vld [vmem:[#allocation4 + $0x38] sm:$0xf]
        %v444 = vld [vmem:[#allocation4 + $0x3c] sm:$0xf]
        %v445 = vld [vmem:[#allocation4 + $0x40] sm:$0xf]
        %v446 = vld [vmem:[#allocation4 + $0x44] sm:$0xf]
        %v447 = vld [vmem:[#allocation4 + $0x48] sm:$0xf]
        %v448 = vld [vmem:[#allocation4 + $0x4c] sm:$0xf]
        %v449 = vld [vmem:[#allocation4 + $0x50] sm:$0xf]
        %v450 = vld [vmem:[#allocation4 + $0x54] sm:$0xf]
        %v451 = vld [vmem:[#allocation4 + $0x58] sm:$0xf]
        %v452 = vld [vmem:[#allocation4 + $0x5c] sm:$0xf]
        %v453 = vld [vmem:[#allocation4 + $0x60] sm:$0xf]
        %v454 = vld [vmem:[#allocation4 + $0x64] sm:$0xf]
        %v455 = vld [vmem:[#allocation4 + $0x68] sm:$0xf]
        %v456 = vld [vmem:[#allocation4 + $0x6c] sm:$0xf]
        %v457 = vld [vmem:[#allocation4 + $0x70] sm:$0xf]
        %v458 = vld [vmem:[#allocation4 + $0x74] sm:$0xf]
        %v459 = vld [vmem:[#allocation4 + $0x78] sm:$0xf]
        %v460 = vld [vmem:[#allocation4 + $0x7c] sm:$0xf]
        %v461 = vld [vmem:[#allocation4 + $0x80] sm:$0xf]
        %v462 = vld [vmem:[#allocation4 + $0x84] sm:$0xf]
        %v463 = vld [vmem:[#allocation4 + $0x88] sm:$0xf]
        %v464 = vld [vmem:[#allocation4 + $0x8c] sm:$0xf]
        %v465 = vld [vmem:[#allocation4 + $0x90] sm:$0xf]
        %v466 = vld [vmem:[#allocation4 + $0x94] sm:$0xf]
        %v467 = vld [vmem:[#allocation4 + $0x98] sm:$0xf]
        %v468 = vld [vmem:[#allocation4 + $0x9c] sm:$0xf]
        %v469 = vld [vmem:[#allocation4 + $0xa0] sm:$0xf]
        %v470 = vld [vmem:[#allocation4 + $0xa4] sm:$0xf]
        %v471 = vld [vmem:[#allocation4 + $0xa8] sm:$0xf]
        %v472 = vld [vmem:[#allocation4 + $0xac] sm:$0xf]
        %v473 = vld [vmem:[#allocation4 + $0xb0] sm:$0xf]
        %v474 = vld [vmem:[#allocation4 + $0xb4] sm:$0xf]
        %v475 = vld [vmem:[#allocation4 + $0xb8] sm:$0xf]
        %v476 = vld [vmem:[#allocation4 + $0xbc] sm:$0xf]
        %v477 = vld [vmem:[%s3] sm:$0x1]
        %v479 = vlaneseq
        %v480 = vshrl.u32 %v479, 7
        %v481 = vsub.s32 0, %v480
        %v482 = vrot.slane %v477, %v481
        %v484 = vrot.slane %v408, 3
        %v485 = vrot.slane %v422, 3
        %v486 = vrot.slane %v428, 3
        %v538 = vunpack.c.l.b16 %v429
        %v539 = vunpack.c.l.b16 %v430
        %v540 = vunpack.c.l.b16 %v431
        %v541 = vunpack.c.l.b16 %v432
        %v542 = vunpack.c.l.b16 %v433
        %v543 = vunpack.c.l.b16 %v434
        %v544 = vunpack.c.l.b16 %v435
        %v545 = vunpack.c.l.b16 %v436
        %v546 = vunpack.c.l.b16 %v437
        %v547 = vunpack.c.l.b16 %v438
        %v548 = vunpack.c.l.b16 %v439
        %v549 = vunpack.c.l.b16 %v440
        %v550 = vunpack.c.l.b16 %v441
        %v551 = vunpack.c.l.b16 %v442
        %v552 = vunpack.c.l.b16 %v443
        %v553 = vunpack.c.l.b16 %v444
        %v554 = vunpack.c.l.b16 %v445
        %v555 = vunpack.c.l.b16 %v446
        %v556 = vunpack.c.l.b16 %v447
        %v557 = vunpack.c.l.b16 %v448
        %v558 = vunpack.c.l.b16 %v449
        %v559 = vunpack.c.l.b16 %v450
        %v560 = vunpack.c.l.b16 %v451
        %v561 = vunpack.c.l.b16 %v452
        %v562 = vunpack.c.l.b16 %v453
        %v563 = vunpack.c.l.b16 %v454
        %v564 = vunpack.c.l.b16 %v455
        %v565 = vunpack.c.l.b16 %v456
        %v566 = vunpack.c.l.b16 %v457
        %v567 = vunpack.c.l.b16 %v458
        %v568 = vunpack.c.l.b16 %v459
        %v569 = vunpack.c.l.b16 %v460
        %v570 = vunpack.c.l.b16 %v461
        %v571 = vunpack.c.l.b16 %v462
        %v572 = vunpack.c.l.b16 %v463
        %v573 = vunpack.c.l.b16 %v464
        %v574 = vunpack.c.l.b16 %v465
        %v575 = vunpack.c.l.b16 %v466
        %v576 = vunpack.c.l.b16 %v467
        %v577 = vunpack.c.l.b16 %v468
        %v578 = vunpack.c.l.b16 %v469
        %v579 = vunpack.c.l.b16 %v470
        %v580 = vunpack.c.l.b16 %v471
        %v581 = vunpack.c.l.b16 %v472
        %v582 = vunpack.c.l.b16 %v473
        %v583 = vunpack.c.l.b16 %v474
        %v584 = vunpack.c.l.b16 %v475
        %v585 = vunpack.c.l.b16 %v476
        %v586 = vpack.c.b16 %v539, %v538
        %v587 = vpack.c.b16 %v541, %v540
        %v588 = vpack.c.b16 %v543, %v542
        %v589 = vpack.c.b16 %v545, %v544
        %v590 = vpack.c.b16 %v547, %v546
        %v591 = vpack.c.b16 %v549, %v548
        %v592 = vpack.c.b16 %v551, %v550
        %v593 = vpack.c.b16 %v553, %v552
        %v594 = vpack.c.b16 %v555, %v554
        %v595 = vpack.c.b16 %v557, %v556
        %v596 = vpack.c.b16 %v559, %v558
        %v597 = vpack.c.b16 %v561, %v560
        %v598 = vpack.c.b16 %v563, %v562
        %v599 = vpack.c.b16 %v565, %v564
        %v600 = vpack.c.b16 %v567, %v566
        %v601 = vpack.c.b16 %v569, %v568
        %v602 = vpack.c.b16 %v571, %v570
        %v603 = vpack.c.b16 %v573, %v572
        %v604 = vpack.c.b16 %v575, %v574
        %v605 = vpack.c.b16 %v577, %v576
        %v606 = vpack.c.b16 %v579, %v578
        %v607 = vpack.c.b16 %v581, %v580
        %v608 = vpack.c.b16 %v583, %v582
        %v609 = vpack.c.b16 %v585, %v584
        %634 = vmatprep.subr.bf16.mxu0 0
        %635 = vmatpush1.bf16.msra.mxu0 %v593
        %636 = vmatprep.subr.bf16.mxu0 0
        %637 = vmatpush1.bf16.msra.mxu0 %v592
        %638 = vmatprep.subr.bf16.mxu0 0
        %639 = vmatpush1.bf16.msra.mxu0 %v591
        %640 = vmatprep.subr.bf16.mxu0 0
        %641 = vmatpush1.bf16.msra.mxu0 %v590
        %642 = vmatprep.subr.bf16.mxu0 0
        %643 = vmatpush1.bf16.msra.mxu0 %v589
        %644 = vmatprep.subr.bf16.mxu0 0
        %645 = vmatpush1.bf16.msra.mxu0 %v588
        %646 = vmatprep.subr.bf16.mxu0 0
        %647 = vmatpush1.bf16.msra.mxu0 %v587
        %648 = vmatprep.subr.bf16.mxu0 0
        %649 = vmatpush1.bf16.msra.mxu0 %v586
        %650 = vmatprep.subr.bf16.mxu0 0
        %651 = vmatpush2.bf16.msra.mxu0 %v601
        %652 = vmatprep.subr.bf16.mxu0 0
        %653 = vmatpush2.bf16.msra.mxu0 %v600
        %654 = vmatprep.subr.bf16.mxu0 0
        %655 = vmatpush2.bf16.msra.mxu0 %v599
        %656 = vmatprep.subr.bf16.mxu0 0
        %657 = vmatpush2.bf16.msra.mxu0 %v598
        %658 = vmatprep.subr.bf16.mxu0 0
        %659 = vmatpush2.bf16.msra.mxu0 %v597
        %660 = vmatprep.subr.bf16.mxu0 0
        %661 = vmatpush2.bf16.msra.mxu0 %v596
        %662 = vmatprep.subr.bf16.mxu0 0
        %663 = vmatpush2.bf16.msra.mxu0 %v595
        %664 = vmatprep.subr.bf16.mxu0 0
        %665 = vmatpush2.bf16.msra.mxu0 %v594
        %666 = vmatprep.mubr.bf16.mxu0 %v485
        %667 = vmatmul.mubr.bf16.gmra.mxu0 %v484
        %v668 = vpop.f32.mrf.mxu0
        %v669 = vadd.f32 %v482, %v668
        %v670 = vpop.f32.mrf.mxu0
        %v671 = vpop.f32.mrf.mxu0
        %v672 = vadd.f32 %v482, %v671
        %v673 = vpop.f32.mrf.mxu0
        %674 = vdwg.mxu0
        %675 = vmatprep.subr.bf16.mxu0 0
        %676 = vmatpush1.bf16.msra.mxu0 %v609
        %677 = vmatprep.subr.bf16.mxu0 0
        %678 = vmatpush1.bf16.msra.mxu0 %v608
        %679 = vmatprep.subr.bf16.mxu0 0
        %680 = vmatpush1.bf16.msra.mxu0 %v607
        %681 = vmatprep.subr.bf16.mxu0 0
        %682 = vmatpush1.bf16.msra.mxu0 %v606
        %683 = vmatprep.subr.bf16.mxu0 0
        %684 = vmatpush1.bf16.msra.mxu0 %v605
        %685 = vmatprep.subr.bf16.mxu0 0
        %686 = vmatpush1.bf16.msra.mxu0 %v604
        %687 = vmatprep.subr.bf16.mxu0 0
        %688 = vmatpush1.bf16.msra.mxu0 %v603
        %689 = vmatprep.subr.bf16.mxu0 0
        %690 = vmatpush1.bf16.msra.mxu0 %v602
        %691 = vmatprep.subr.bf16.mxu0 0
        %692 = vmatpush2.bf16.msra.mxu0 0
        %693 = vmatprep.subr.bf16.mxu0 0
        %694 = vmatpush2.bf16.msra.mxu0 0
        %695 = vmatprep.subr.bf16.mxu0 0
        %696 = vmatpush2.bf16.msra.mxu0 0
        %697 = vmatprep.subr.bf16.mxu0 0
        %698 = vmatpush2.bf16.msra.mxu0 0
        %699 = vmatprep.subr.bf16.mxu0 0
        %700 = vmatpush2.bf16.msra.mxu0 0
        %701 = vmatprep.subr.bf16.mxu0 0
        %702 = vmatpush2.bf16.msra.mxu0 0
        %703 = vmatprep.subr.bf16.mxu0 0
        %704 = vmatpush2.bf16.msra.mxu0 0
        %705 = vmatprep.subr.bf16.mxu0 0
        %706 = vmatpush2.bf16.msra.mxu0 0
        %707 = vmatprep.mubr.bf16.mxu0 0
        %708 = vmatmul.mubr.bf16.gmra.mxu0 %v486
        %v709 = vpop.f32.mrf.mxu0
        %v710 = vadd.f32 %v669, %v709
        %v711 = vpop.f32.mrf.mxu0
        %v712 = vpop.f32.mrf.mxu0
        %v713 = vadd.f32 %v672, %v712
        %v714 = vpop.f32.mrf.mxu0
        %715 = vdwg.mxu0
        %v716 = vmax.f32 %v710, 0.0
        %v717 = vmax.f32 %v713, 0.0
        %s718 = ssub.s32 %s370, 1
        %v719 = vstv %s718
        %v720 = vadd.s32 %v719, %v373
        %v721 = vadd.s32 %v719, %v374
        %vm722 = vcmp.ge.s32.totalorder %v720, 0
        %vm723 = vcmp.ge.s32.totalorder %v721, 0
        %vm724 = vcmp.lt.s32.totalorder %v720, 20
        %vm725 = vcmp.lt.s32.totalorder %v721, 20
        %vm726 = vmand %vm722, %vm724
        %vm727 = vmand %vm723, %vm725
        %v728 = vsel %vm726, 1, 0
        %v729 = vsel %vm727, 1, 0
        %vm730 = vcmp.eq.s32.totalorder %v728, 1
        %vm731 = vcmp.eq.s32.totalorder %v729, 1
        %v732 = vsel %vm730, %v716, 0.0
        %v733 = vsel %vm731, %v717, 0.0
        %v734 = vpack.c.bf16 %v733, %v732
        %v735 = vld [vmem:[#allocation6] sm:$0xf]
        %v736 = vld [vmem:[#allocation6 + $0x4] sm:$0xf]
        %v737 = vld [vmem:[#allocation6 + $0x8] sm:$0xf]
        %v738 = vld [vmem:[#allocation6 + $0xc] sm:$0xf]
        %v739 = vld [vmem:[#allocation6 + $0x10] sm:$0xf]
        %v740 = vld [vmem:[#allocation6 + $0x14] sm:$0xf]
        %v741 = vld [vmem:[#allocation6 + $0x18] sm:$0xf]
        %v742 = vld [vmem:[#allocation6 + $0x1c] sm:$0xf]
        %v743 = vld [vmem:[#allocation6 + $0x20] sm:$0xf]
        %v744 = vld [vmem:[#allocation6 + $0x24] sm:$0xf]
        %v745 = vld [vmem:[#allocation6 + $0x28] sm:$0xf]
        %v746 = vld [vmem:[#allocation6 + $0x2c] sm:$0xf]
        %v747 = vld [vmem:[#allocation6 + $0x30] sm:$0xf]
        %v748 = vld [vmem:[#allocation6 + $0x34] sm:$0xf]
        %v749 = vld [vmem:[#allocation6 + $0x38] sm:$0xf]
        %v750 = vld [vmem:[#allocation6 + $0x3c] sm:$0xf]
        %v767 = vunpack.c.l.b16 %v735
        %v768 = vunpack.c.l.b16 %v736
        %v769 = vunpack.c.l.b16 %v737
        %v770 = vunpack.c.l.b16 %v738
        %v771 = vunpack.c.l.b16 %v739
        %v772 = vunpack.c.l.b16 %v740
        %v773 = vunpack.c.l.b16 %v741
        %v774 = vunpack.c.l.b16 %v742
        %v775 = vunpack.c.l.b16 %v743
        %v776 = vunpack.c.l.b16 %v744
        %v777 = vunpack.c.l.b16 %v745
        %v778 = vunpack.c.l.b16 %v746
        %v779 = vunpack.c.l.b16 %v747
        %v780 = vunpack.c.l.b16 %v748
        %v781 = vunpack.c.l.b16 %v749
        %v782 = vunpack.c.l.b16 %v750
        %v783 = vpack.c.b16 %v768, %v767
        %v784 = vpack.c.b16 %v770, %v769
        %v785 = vpack.c.b16 %v772, %v771
        %v786 = vpack.c.b16 %v774, %v773
        %v787 = vpack.c.b16 %v776, %v775
        %v788 = vpack.c.b16 %v778, %v777
        %v789 = vpack.c.b16 %v780, %v779
        %v790 = vpack.c.b16 %v782, %v781
        %799 = vmatprep.subr.bf16.mxu0 0
        %800 = vmatpush1.bf16.msra.mxu0 %v790
        %801 = vmatprep.subr.bf16.mxu0 0
        %802 = vmatpush1.bf16.msra.mxu0 %v789
        %803 = vmatprep.subr.bf16.mxu0 0
        %804 = vmatpush1.bf16.msra.mxu0 %v788
        %805 = vmatprep.subr.bf16.mxu0 0
        %806 = vmatpush1.bf16.msra.mxu0 %v787
        %807 = vmatprep.subr.bf16.mxu0 0
        %808 = vmatpush1.bf16.msra.mxu0 %v786
        %809 = vmatprep.subr.bf16.mxu0 0
        %810 = vmatpush1.bf16.msra.mxu0 %v785
        %811 = vmatprep.subr.bf16.mxu0 0
        %812 = vmatpush1.bf16.msra.mxu0 %v784
        %813 = vmatprep.subr.bf16.mxu0 0
        %814 = vmatpush1.bf16.msra.mxu0 %v783
        %815 = vmatprep.subr.bf16.mxu0 0
        %816 = vmatpush2.bf16.msra.mxu0 0
        %817 = vmatprep.subr.bf16.mxu0 0
        %818 = vmatpush2.bf16.msra.mxu0 0
        %819 = vmatprep.subr.bf16.mxu0 0
        %820 = vmatpush2.bf16.msra.mxu0 0
        %821 = vmatprep.subr.bf16.mxu0 0
        %822 = vmatpush2.bf16.msra.mxu0 0
        %823 = vmatprep.subr.bf16.mxu0 0
        %824 = vmatpush2.bf16.msra.mxu0 0
        %825 = vmatprep.subr.bf16.mxu0 0
        %826 = vmatpush2.bf16.msra.mxu0 0
        %827 = vmatprep.subr.bf16.mxu0 0
        %828 = vmatpush2.bf16.msra.mxu0 0
        %829 = vmatprep.subr.bf16.mxu0 0
        %830 = vmatpush2.bf16.msra.mxu0 0
        %831 = vmatprep.mubr.bf16.mxu0 0
        %832 = vmatmul.mubr.bf16.gmra.mxu0 %v734
        %v833 = vpop.f32.mrf.mxu0
        %v834 = vadd.f32 0.0, %v833
        %v835 = vpop.f32.mrf.mxu0
        %v836 = vpop.f32.mrf.mxu0
        %v837 = vpop.f32.mrf.mxu0
        %838 = vdwg.mxu0
        %s839 = scalar_lea.vmem [#allocation6], 64
        %v840 = vld [vmem:[%s839] sm:$0xf]
        %v841 = vld [vmem:[%s839 + $0x4] sm:$0xf]
        %v842 = vld [vmem:[%s839 + $0x8] sm:$0xf]
        %v843 = vld [vmem:[%s839 + $0xc] sm:$0xf]
        %v844 = vld [vmem:[%s839 + $0x10] sm:$0xf]
        %v845 = vld [vmem:[%s839 + $0x14] sm:$0xf]
        %v846 = vld [vmem:[%s839 + $0x18] sm:$0xf]
        %v847 = vld [vmem:[%s839 + $0x1c] sm:$0xf]
        %v848 = vld [vmem:[%s839 + $0x20] sm:$0xf]
        %v849 = vld [vmem:[%s839 + $0x24] sm:$0xf]
        %v850 = vld [vmem:[%s839 + $0x28] sm:$0xf]
        %v851 = vld [vmem:[%s839 + $0x2c] sm:$0xf]
        %v852 = vld [vmem:[%s839 + $0x30] sm:$0xf]
        %v853 = vld [vmem:[%s839 + $0x34] sm:$0xf]
        %v854 = vld [vmem:[%s839 + $0x38] sm:$0xf]
        %v855 = vld [vmem:[%s839 + $0x3c] sm:$0xf]
        %v872 = vunpack.c.l.b16 %v840
        %v873 = vunpack.c.l.b16 %v841
        %v874 = vunpack.c.l.b16 %v842
        %v875 = vunpack.c.l.b16 %v843
        %v876 = vunpack.c.l.b16 %v844
        %v877 = vunpack.c.l.b16 %v845
        %v878 = vunpack.c.l.b16 %v846
        %v879 = vunpack.c.l.b16 %v847
        %v880 = vunpack.c.l.b16 %v848
        %v881 = vunpack.c.l.b16 %v849
        %v882 = vunpack.c.l.b16 %v850
        %v883 = vunpack.c.l.b16 %v851
        %v884 = vunpack.c.l.b16 %v852
        %v885 = vunpack.c.l.b16 %v853
        %v886 = vunpack.c.l.b16 %v854
        %v887 = vunpack.c.l.b16 %v855
        %v888 = vpack.c.b16 %v873, %v872
        %v889 = vpack.c.b16 %v875, %v874
        %v890 = vpack.c.b16 %v877, %v876
        %v891 = vpack.c.b16 %v879, %v878
        %v892 = vpack.c.b16 %v881, %v880
        %v893 = vpack.c.b16 %v883, %v882
        %v894 = vpack.c.b16 %v885, %v884
        %v895 = vpack.c.b16 %v887, %v886
        %904 = vmatprep.subr.bf16.mxu0 0
        %905 = vmatpush1.bf16.msra.mxu0 %v895
        %906 = vmatprep.subr.bf16.mxu0 0
        %907 = vmatpush1.bf16.msra.mxu0 %v894
        %908 = vmatprep.subr.bf16.mxu0 0
        %909 = vmatpush1.bf16.msra.mxu0 %v893
        %910 = vmatprep.subr.bf16.mxu0 0
        %911 = vmatpush1.bf16.msra.mxu0 %v892
        %912 = vmatprep.subr.bf16.mxu0 0
        %913 = vmatpush1.bf16.msra.mxu0 %v891
        %914 = vmatprep.subr.bf16.mxu0 0
        %915 = vmatpush1.bf16.msra.mxu0 %v890
        %916 = vmatprep.subr.bf16.mxu0 0
        %917 = vmatpush1.bf16.msra.mxu0 %v889
        %918 = vmatprep.subr.bf16.mxu0 0
        %919 = vmatpush1.bf16.msra.mxu0 %v888
        %920 = vmatprep.subr.bf16.mxu0 0
        %921 = vmatpush2.bf16.msra.mxu0 0
        %922 = vmatprep.subr.bf16.mxu0 0
        %923 = vmatpush2.bf16.msra.mxu0 0
        %924 = vmatprep.subr.bf16.mxu0 0
        %925 = vmatpush2.bf16.msra.mxu0 0
        %926 = vmatprep.subr.bf16.mxu0 0
        %927 = vmatpush2.bf16.msra.mxu0 0
        %928 = vmatprep.subr.bf16.mxu0 0
        %929 = vmatpush2.bf16.msra.mxu0 0
        %930 = vmatprep.subr.bf16.mxu0 0
        %931 = vmatpush2.bf16.msra.mxu0 0
        %932 = vmatprep.subr.bf16.mxu0 0
        %933 = vmatpush2.bf16.msra.mxu0 0
        %934 = vmatprep.subr.bf16.mxu0 0
        %935 = vmatpush2.bf16.msra.mxu0 0
        %936 = vmatprep.mubr.bf16.mxu0 0
        %937 = vmatmul.mubr.bf16.gmra.mxu0 %v734
        %v938 = vpop.f32.mrf.mxu0
        %v939 = vadd.f32 0.0, %v938
        %v940 = vpop.f32.mrf.mxu0
        %v941 = vpop.f32.mrf.mxu0
        %v942 = vadd.f32 0.0, %v941
        %v943 = vpop.f32.mrf.mxu0
        %944 = vdwg.mxu0
        %vm947 = vcmask 1046528
        %v948 = vrot.slane %v939, 1
        %v949 = vrot.slane %v942, 1
        %v950 = vsel %vm947, %v948, %v949
        %v952 = vadd.f32 %v834, %v950
        %s953 = scalar_lea.vmem [#allocation6], 128
        %v954 = vld [vmem:[%s953] sm:$0xf]
        %v955 = vld [vmem:[%s953 + $0x4] sm:$0xf]
        %v956 = vld [vmem:[%s953 + $0x8] sm:$0xf]
        %v957 = vld [vmem:[%s953 + $0xc] sm:$0xf]
        %v958 = vld [vmem:[%s953 + $0x10] sm:$0xf]
        %v959 = vld [vmem:[%s953 + $0x14] sm:$0xf]
        %v960 = vld [vmem:[%s953 + $0x18] sm:$0xf]
        %v961 = vld [vmem:[%s953 + $0x1c] sm:$0xf]
        %v962 = vld [vmem:[%s953 + $0x20] sm:$0xf]
        %v963 = vld [vmem:[%s953 + $0x24] sm:$0xf]
        %v964 = vld [vmem:[%s953 + $0x28] sm:$0xf]
        %v965 = vld [vmem:[%s953 + $0x2c] sm:$0xf]
        %v966 = vld [vmem:[%s953 + $0x30] sm:$0xf]
        %v967 = vld [vmem:[%s953 + $0x34] sm:$0xf]
        %v968 = vld [vmem:[%s953 + $0x38] sm:$0xf]
        %v969 = vld [vmem:[%s953 + $0x3c] sm:$0xf]
        %v986 = vunpack.c.l.b16 %v954
        %v987 = vunpack.c.l.b16 %v955
        %v988 = vunpack.c.l.b16 %v956
        %v989 = vunpack.c.l.b16 %v957
        %v990 = vunpack.c.l.b16 %v958
        %v991 = vunpack.c.l.b16 %v959
        %v992 = vunpack.c.l.b16 %v960
        %v993 = vunpack.c.l.b16 %v961
        %v994 = vunpack.c.l.b16 %v962
        %v995 = vunpack.c.l.b16 %v963
        %v996 = vunpack.c.l.b16 %v964
        %v997 = vunpack.c.l.b16 %v965
        %v998 = vunpack.c.l.b16 %v966
        %v999 = vunpack.c.l.b16 %v967
        %v1000 = vunpack.c.l.b16 %v968
        %v1001 = vunpack.c.l.b16 %v969
        %v1002 = vpack.c.b16 %v987, %v986
        %v1003 = vpack.c.b16 %v989, %v988
        %v1004 = vpack.c.b16 %v991, %v990
        %v1005 = vpack.c.b16 %v993, %v992
        %v1006 = vpack.c.b16 %v995, %v994
        %v1007 = vpack.c.b16 %v997, %v996
        %v1008 = vpack.c.b16 %v999, %v998
        %v1009 = vpack.c.b16 %v1001, %v1000
        %1018 = vmatprep.subr.bf16.mxu0 0
        %1019 = vmatpush1.bf16.msra.mxu0 %v1009
        %1020 = vmatprep.subr.bf16.mxu0 0
        %1021 = vmatpush1.bf16.msra.mxu0 %v1008
        %1022 = vmatprep.subr.bf16.mxu0 0
        %1023 = vmatpush1.bf16.msra.mxu0 %v1007
        %1024 = vmatprep.subr.bf16.mxu0 0
        %1025 = vmatpush1.bf16.msra.mxu0 %v1006
        %1026 = vmatprep.subr.bf16.mxu0 0
        %1027 = vmatpush1.bf16.msra.mxu0 %v1005
        %1028 = vmatprep.subr.bf16.mxu0 0
        %1029 = vmatpush1.bf16.msra.mxu0 %v1004
        %1030 = vmatprep.subr.bf16.mxu0 0
        %1031 = vmatpush1.bf16.msra.mxu0 %v1003
        %1032 = vmatprep.subr.bf16.mxu0 0
        %1033 = vmatpush1.bf16.msra.mxu0 %v1002
        %1034 = vmatprep.subr.bf16.mxu0 0
        %1035 = vmatpush2.bf16.msra.mxu0 0
        %1036 = vmatprep.subr.bf16.mxu0 0
        %1037 = vmatpush2.bf16.msra.mxu0 0
        %1038 = vmatprep.subr.bf16.mxu0 0
        %1039 = vmatpush2.bf16.msra.mxu0 0
        %1040 = vmatprep.subr.bf16.mxu0 0
        %1041 = vmatpush2.bf16.msra.mxu0 0
        %1042 = vmatprep.subr.bf16.mxu0 0
        %1043 = vmatpush2.bf16.msra.mxu0 0
        %1044 = vmatprep.subr.bf16.mxu0 0
        %1045 = vmatpush2.bf16.msra.mxu0 0
        %1046 = vmatprep.subr.bf16.mxu0 0
        %1047 = vmatpush2.bf16.msra.mxu0 0
        %1048 = vmatprep.subr.bf16.mxu0 0
        %1049 = vmatpush2.bf16.msra.mxu0 0
        %1050 = vmatprep.mubr.bf16.mxu0 0
        %1051 = vmatmul.mubr.bf16.gmra.mxu0 %v734
        %v1052 = vpop.f32.mrf.mxu0
        %v1053 = vadd.f32 0.0, %v1052
        %v1054 = vpop.f32.mrf.mxu0
        %v1055 = vpop.f32.mrf.mxu0
        %v1056 = vadd.f32 0.0, %v1055
        %v1057 = vpop.f32.mrf.mxu0
        %1058 = vdwg.mxu0
        %vm1061 = vcmask 1045504
        %v1062 = vrot.slane %v1053, 2
        %v1063 = vrot.slane %v1056, 2
        %v1064 = vsel %vm1061, %v1062, %v1063
        %v1066 = vadd.f32 %v952, %v1064
        %v1067 = vld [vmem:[%s5] sm:$0x1]
        %v1069 = vlaneseq
        %v1070 = vshrl.u32 %v1069, 7
        %v1071 = vsub.s32 0, %v1070
        %v1072 = vrot.slane %v1067, %v1071
        %v1074 = vadd.f32 %v1066, %v1072
        %1075 = vst [vmem:[%s355] sm:$0xff] %v1074
        %p1076 = scmp.lt.s32.totalorder %s25, 1
        %s1077 = scalar_select %p1076, %s25, 1
        %p1078 = scmp.lt.s32.totalorder %s26, 2
        %s1079 = scalar_select %p1078, %s26, 2
        %s1080 = smul.addr %s1077, 3
        %s1081 = sadd.s32 %s1079, %s1080
        %s1082 = smul.addr %s1081, 8
        %s1083 = scalar_lea.vmem %s6, %s1082
        // Predicated region
        $region57: #{tpu_custom_call.1} parent=43 // pred_check
          %p1084 = pneg %p193
        $region58: #{tpu_custom_call.1} parent=43 // pred_check_branch
          %1086 = sbr.rel (%p1084) target = $region60
        $region59: #{tpu_custom_call.1} parent=43 // pred_region
          _
        $region60: #{tpu_custom_call.1} parent=43 // pred_fallthru
          _
      $region44: #{tpu_custom_call.1} parent=5 // pred_fallthru
        _
      %p1087 = scmp.le.s32.totalorder 2, %s16
      // Predicated region
      $region61: #{tpu_custom_call.1} parent=5 // pred_check
        %p1088 = pneg %p1087
      $region62: #{tpu_custom_call.1} parent=5 // pred_check_branch
        %1090 = sbr.rel (%p1088) target = $region64
      $region63: #{tpu_custom_call.1} parent=5 // pred_region
        %s1091 = ssub.s32 %s16, 2
        // Predicated region
        $region65: #{tpu_custom_call.1} parent=63 // pred_check
          %p1092 = pneg %p199
        $region66: #{tpu_custom_call.1} parent=63 // pred_check_branch
          %1094 = sbr.rel (%p1092) target = $region68
        $region67: #{tpu_custom_call.1} parent=63 // pred_region
          %p1095 = scmp.lt.s32.totalorder %s27, 1
          %s1096 = scalar_select %p1095, %s27, 1
          %p1097 = scmp.lt.s32.totalorder %s28, 2
          %s1098 = scalar_select %p1097, %s28, 2
          %s1099 = smul.addr %s1096, 3
          %s1100 = sadd.s32 %s1098, %s1099
          %s1101 = smul.addr %s1100, 8
          %s1102 = scalar_lea.vmem %s6, %s1101
        $region68: #{tpu_custom_call.1} parent=63 // pred_fallthru
          _
      $region64: #{tpu_custom_call.1} parent=5 // pred_fallthru
        _
    $region6: #{tpu_custom_call.1} parent=1 // loop_footer
      %s20 = sadd.s32 1, %s16
    $region7: #{tpu_custom_call.1} parent=1 // loop_footer_branch
      %15 = sbr.rel target = $region3
    $region8: #{tpu_custom_call.1} parent=1 // loop_exit
      _
    %1103 = vsyncpa [#allocation3], 1
    %s1104 = scalar_lea.sflag [#allocation3], 1
    %1105 = vsyncpa %s1104, 1
    %1106 = vsyncpa [#allocation5], 1

</llo_original>
